<compile_context>
chip_gen: v7x
topology: tpu7x:2x2x1
jax: 0.10.0
libtpu: 0.0.40
codegen_flags: <defaults>
</compile_context>

<pallas_src>
import jax
import jax.numpy as jnp
from jax.experimental import pallas as pl
from jax.experimental.pallas import tpu as pltpu


def _round_up(n, m):
    return ((n + m - 1) // m) * m


def _sigmoid_1eup(x):
    # sigmoid(x) == 0.5 * tanh(0.5 * x) + 0.5 : a single EUP push per vreg.
    return 0.5 * jnp.tanh(0.5 * x) + 0.5


def insectnet_kernel(x_ref, w1_ref, b1_ref, w2_ref, b2_ref, w3_ref, b3_ref, o_ref):
    # x_ref: (8, TILE_B) f32 — feature-major (features padded 2->8), batch on lanes.
    x = x_ref[...]

    # fc1: Linear(2 -> 200) + Sigmoid on the MXU (K padded to 8; zero columns of
    # w1 x zero rows of x contribute nothing).  f32 operands keep input precision;
    # K=8 makes the f32 MXU cost negligible.
    h1_pre = jnp.dot(w1_ref[...], x, preferred_element_type=jnp.float32) + b1_ref[...]
    h1 = _sigmoid_1eup(h1_pre)                               # (200, TILE_B) f32

    # fc2: Linear(200 -> 50) + Sigmoid.  bf16 MXU operands, f32 accumulation.
    h2_pre = jnp.dot(w2_ref[...], h1.astype(jnp.bfloat16),
                     preferred_element_type=jnp.float32) + b2_ref[...]
    h2 = _sigmoid_1eup(h2_pre)                               # (50, TILE_B) f32

    # fc3: Linear(50 -> 3), no activation.  bf16 MXU operands, f32 accumulation.
    out = jnp.dot(w3_ref[...], h2.astype(jnp.bfloat16),
                  preferred_element_type=jnp.float32) + b3_ref[...]
    o_ref[...] = out.astype(o_ref.dtype)                     # (3, TILE_B) lane-dense


def insectnet_forward(x, params, tile_b=4096):
    """x: (B, 2) float32. params: PyTorch-oriented weights (out,in), biases (out,1)."""
    B = x.shape[0]

    # Adaptive lane-dense tile: big enough to amortize the ~0.35us/step grid
    # overhead, small enough that ragged batches don't pad to a full 4K tile.
    tile_b = min(tile_b, _round_up(B, 512))
    tile_b = _round_up(max(tile_b, 128), 128)
    B_pad = _round_up(B, tile_b)

    # Feature-major layout + padding done in one shot: (2, B) -> (8, B_pad).
    # Padded rows/columns are zeros; padded batch columns are sliced away below.
    xT = jnp.pad(x.T, ((0, 6), (0, B_pad - B)))

    # Pad fc1's contraction dim 2 -> 8 (zeros) and pre-cast fc2/fc3 weights to
    # bf16 (native MXU path); biases stay f32 columns for the broadcast adds.
    w1p = jnp.pad(params["w1"], ((0, 0), (0, 6)))            # (200, 8) f32
    w2b = params["w2"].astype(jnp.bfloat16)                  # (50, 200) bf16
    w3b = params["w3"].astype(jnp.bfloat16)                  # (3, 50)   bf16
    b1, b2, b3 = params["b1"], params["b2"], params["b3"]

    grid = (B_pad // tile_b,)

    # Advisory cost estimate for XLA scheduling (weights DMA'd once: constant
    # index_map blocks are not re-fetched per grid step).
    flops = 2 * B_pad * (2 * 200 + 200 * 50 + 50 * 3)
    transcendentals = B_pad * (200 + 50)                     # one tanh per sigmoid
    param_bytes = sum(int(a.size) * a.dtype.itemsize
                      for a in (w1p, b1, w2b, b2, w3b, b3))
    bytes_accessed = B_pad * (8 + 3) * 4 + param_bytes

    outT = pl.pallas_call(
        insectnet_kernel,
        out_shape=jax.ShapeDtypeStruct((3, B_pad), jnp.float32),
        grid=grid,
        in_specs=[
            pl.BlockSpec((8, tile_b), lambda i: (0, i)),     # x (feature-major)
            pl.BlockSpec((200, 8), lambda i: (0, 0)),        # w1 (f32, K padded)
            pl.BlockSpec((200, 1), lambda i: (0, 0)),        # b1
            pl.BlockSpec((50, 200), lambda i: (0, 0)),       # w2 (bf16)
            pl.BlockSpec((50, 1), lambda i: (0, 0)),         # b2
            pl.BlockSpec((3, 50), lambda i: (0, 0)),         # w3 (bf16)
            pl.BlockSpec((3, 1), lambda i: (0, 0)),          # b3
        ],
        out_specs=pl.BlockSpec((3, tile_b), lambda i: (0, i)),
        compiler_params=pltpu.CompilerParams(
            # Megacore sharding of batch tiles.  On v7x, if a profile shows one
            # TC idle, switch to (pltpu.CORE_PARALLEL,).
            dimension_semantics=("parallel",),
            # Explicit scoped-VMEM budget with headroom; ~9 MiB peak needed at
            # tile_b=4096, and 32 MiB is within every generation's physical VMEM.
            vmem_limit_bytes=32 * 1024 * 1024,
        ),
        cost_estimate=pl.CostEstimate(
            flops=flops,
            transcendentals=transcendentals,
            bytes_accessed=bytes_accessed,
        ),
    )(xT, w1p, b1, w2b, b2, w3b, b3)

    return outT.T[:B]                                        # back to (B, 3)


def init_params(key):
    """Deterministic init mimicking PyTorch's default Linear init
    (uniform in +-1/sqrt(fan_in)); weights kept in (out, in) orientation,
    biases stored as (out, 1) columns for the feature-major kernel layout."""
    def linear(key, fan_in, fan_out):
        kw, kb = jax.random.split(key)
        bound = 1.0 / jnp.sqrt(fan_in)
        w = jax.random.uniform(kw, (fan_out, fan_in), jnp.float32, -bound, bound)
        b = jax.random.uniform(kb, (fan_out, 1), jnp.float32, -bound, bound)
        return w, b

    k1, k2, k3 = jax.random.split(key, 3)
    w1, b1 = linear(k1, 2, 200)
    w2, b2 = linear(k2, 200, 50)
    w3, b3 = linear(k3, 50, 3)
    return {"w1": w1, "b1": b1, "w2": w2, "b2": b2, "w3": w3, "b3": b3}


def reference_forward(x, p):
    """Pure-f32 reference matching the PyTorch module's semantics exactly."""
    h1 = jax.nn.sigmoid(x @ p["w1"].T + p["b1"].T)
    h2 = jax.nn.sigmoid(h1 @ p["w2"].T + p["b2"].T)
    return h2 @ p["w3"].T + p["b3"].T


if __name__ == "__main__":
    key = jax.random.PRNGKey(0)
    kx, kp = jax.random.split(key)

    B = 8
    x = jax.random.normal(kx, (B, 2), dtype=jnp.float32)
    params = init_params(kp)

    out = jax.block_until_ready(insectnet_forward(x, params))
    ref = reference_forward(x, params)
    assert out.shape == (B, 3)
    # Tolerance relaxed vs. the all-f32 version because fc2/fc3 use bf16 MXU
    # operands (f32 accumulation); typical error is ~1e-2 absolute.
    assert jnp.allclose(out, ref, atol=5e-2, rtol=5e-2)

    # Multi-tile, ragged-batch case to exercise the grid + padding paths.
    B2 = 1200
    x2 = jax.random.normal(kx, (B2, 2), dtype=jnp.float32)
    out2 = jax.block_until_ready(insectnet_forward(x2, params, tile_b=512))
    ref2 = reference_forward(x2, params)
    assert out2.shape == (B2, 3)
    assert jnp.allclose(out2, ref2, atol=5e-2, rtol=5e-2)

    print("KERNEL_OK")
</pallas_src>

<mosaic_0001>
module attributes {stable_mosaic.version = 11 : i64} {
  func.func @insectnet_kernel(%arg0: i32, %arg1: memref<8x512xf32, #tpu.memory_space<vmem>>, %arg2: memref<200x8xf32, #tpu.memory_space<vmem>>, %arg3: memref<200x1xf32, #tpu.memory_space<vmem>>, %arg4: memref<50x200xbf16, #tpu.memory_space<vmem>>, %arg5: memref<50x1xf32, #tpu.memory_space<vmem>>, %arg6: memref<3x50xbf16, #tpu.memory_space<vmem>>, %arg7: memref<3x1xf32, #tpu.memory_space<vmem>>, %arg8: memref<3x512xf32, #tpu.memory_space<vmem>>) attributes {dimension_semantics = [#tpu.dimension_semantics<parallel>], iteration_bounds = array<i64: 1>, scalar_prefetch = 0 : i64, scratch_operands = 0 : i64, tpu.core_type = #tpu.core_type<tc>, window_params = [{transform_indices = @transform_0, window_bounds = array<i64: 8, 512>}, {pipeline_mode = #tpu.pipeline_mode<synchronous>, transform_indices = @transform_1, window_bounds = array<i64: 200, 8>}, {pipeline_mode = #tpu.pipeline_mode<synchronous>, transform_indices = @transform_2, window_bounds = array<i64: 200, 1>}, {pipeline_mode = #tpu.pipeline_mode<synchronous>, transform_indices = @transform_3, window_bounds = array<i64: 50, 200>}, {pipeline_mode = #tpu.pipeline_mode<synchronous>, transform_indices = @transform_4, window_bounds = array<i64: 50, 1>}, {pipeline_mode = #tpu.pipeline_mode<synchronous>, transform_indices = @transform_5, window_bounds = array<i64: 3, 50>}, {pipeline_mode = #tpu.pipeline_mode<synchronous>, transform_indices = @transform_6, window_bounds = array<i64: 3, 1>}, {transform_indices = @transform_7, window_bounds = array<i64: 3, 512>}]} {
    %c0 = arith.constant 0 : index
    %c0_0 = arith.constant 0 : index
    %0 = vector.load %arg1[%c0, %c0_0] : memref<8x512xf32, #tpu.memory_space<vmem>>, vector<8x512xf32>
    %c0_1 = arith.constant 0 : index
    %c0_2 = arith.constant 0 : index
    %1 = vector.load %arg2[%c0_1, %c0_2] : memref<200x8xf32, #tpu.memory_space<vmem>>, vector<200x8xf32>
    %cst = arith.constant dense<0.000000e+00> : vector<200x512xf32>
    %2 = tpu.matmul %1, %0, %cst {dimension_numbers = #tpu.dot_dimension_numbers<[1], [0], [0], [1], [0, 0, 1, 1], [], []>} : vector<200x8xf32>, vector<8x512xf32>, vector<200x512xf32> -> vector<200x512xf32>
    %c0_3 = arith.constant 0 : index
    %c0_4 = arith.constant 0 : index
    %3 = vector.load %arg3[%c0_3, %c0_4] : memref<200x1xf32, #tpu.memory_space<vmem>>, vector<200x1xf32>
    %4 = vector.broadcast %3 : vector<200x1xf32> to vector<200x512xf32>
    %5 = arith.addf %2, %4 : vector<200x512xf32>
    %cst_5 = arith.constant 5.000000e-01 : f32
    %6 = vector.broadcast %cst_5 : f32 to vector<200x512xf32>
    %7 = arith.mulf %6, %5 : vector<200x512xf32>
    %8 = math.tanh %7 : vector<200x512xf32>
    %cst_6 = arith.constant 5.000000e-01 : f32
    %9 = vector.broadcast %cst_6 : f32 to vector<200x512xf32>
    %10 = arith.mulf %9, %8 : vector<200x512xf32>
    %cst_7 = arith.constant 5.000000e-01 : f32
    %11 = vector.broadcast %cst_7 : f32 to vector<200x512xf32>
    %12 = arith.addf %10, %11 : vector<200x512xf32>
    %c0_8 = arith.constant 0 : index
    %c0_9 = arith.constant 0 : index
    %13 = vector.load %arg4[%c0_8, %c0_9] : memref<50x200xbf16, #tpu.memory_space<vmem>>, vector<50x200xbf16>
    %14 = arith.truncf %12 : vector<200x512xf32> to vector<200x512xbf16>
    %cst_10 = arith.constant dense<0.000000e+00> : vector<50x512xf32>
    %15 = tpu.matmul %13, %14, %cst_10 {dimension_numbers = #tpu.dot_dimension_numbers<[1], [0], [0], [1], [0, 0, 1, 1], [], []>} : vector<50x200xbf16>, vector<200x512xbf16>, vector<50x512xf32> -> vector<50x512xf32>
    %c0_11 = arith.constant 0 : index
    %c0_12 = arith.constant 0 : index
    %16 = vector.load %arg5[%c0_11, %c0_12] : memref<50x1xf32, #tpu.memory_space<vmem>>, vector<50x1xf32>
    %17 = vector.broadcast %16 : vector<50x1xf32> to vector<50x512xf32>
    %18 = arith.addf %15, %17 : vector<50x512xf32>
    %cst_13 = arith.constant 5.000000e-01 : f32
    %19 = vector.broadcast %cst_13 : f32 to vector<50x512xf32>
    %20 = arith.mulf %19, %18 : vector<50x512xf32>
    %21 = math.tanh %20 : vector<50x512xf32>
    %cst_14 = arith.constant 5.000000e-01 : f32
    %22 = vector.broadcast %cst_14 : f32 to vector<50x512xf32>
    %23 = arith.mulf %22, %21 : vector<50x512xf32>
    %cst_15 = arith.constant 5.000000e-01 : f32
    %24 = vector.broadcast %cst_15 : f32 to vector<50x512xf32>
    %25 = arith.addf %23, %24 : vector<50x512xf32>
    %c0_16 = arith.constant 0 : index
    %c0_17 = arith.constant 0 : index
    %26 = vector.load %arg6[%c0_16, %c0_17] : memref<3x50xbf16, #tpu.memory_space<vmem>>, vector<3x50xbf16>
    %27 = arith.truncf %25 : vector<50x512xf32> to vector<50x512xbf16>
    %cst_18 = arith.constant dense<0.000000e+00> : vector<3x512xf32>
    %28 = tpu.matmul %26, %27, %cst_18 {dimension_numbers = #tpu.dot_dimension_numbers<[1], [0], [0], [1], [0, 0, 1, 1], [], []>} : vector<3x50xbf16>, vector<50x512xbf16>, vector<3x512xf32> -> vector<3x512xf32>
    %c0_19 = arith.constant 0 : index
    %c0_20 = arith.constant 0 : index
    %29 = vector.load %arg7[%c0_19, %c0_20] : memref<3x1xf32, #tpu.memory_space<vmem>>, vector<3x1xf32>
    %30 = vector.broadcast %29 : vector<3x1xf32> to vector<3x512xf32>
    %31 = arith.addf %28, %30 : vector<3x512xf32>
    %c0_21 = arith.constant 0 : index
    %c0_22 = arith.constant 0 : index
    %32 = vector.load %arg8[%c0_21, %c0_22] : memref<3x512xf32, #tpu.memory_space<vmem>>, vector<3x512xf32>
    tpu.vector_store %arg8[%c0_21, %c0_22], %31 {strides = array<i32>} : memref<3x512xf32, #tpu.memory_space<vmem>>, vector<3x512xf32>,
    return
  }
  func.func @transform_0(%arg0: i32) -> (i32, i32) {
    %c0_i32 = arith.constant 0 : i32
    %c0_i32_0 = arith.constant 0 : i32
    return %c0_i32, %arg0 : i32, i32
  }
  func.func @transform_1(%arg0: i32) -> (i32, i32) {
    %c0_i32 = arith.constant 0 : i32
    %c0_i32_0 = arith.constant 0 : i32
    %c0_i32_1 = arith.constant 0 : i32
    return %c0_i32, %c0_i32_0 : i32, i32
  }
  func.func @transform_2(%arg0: i32) -> (i32, i32) {
    %c0_i32 = arith.constant 0 : i32
    %c0_i32_0 = arith.constant 0 : i32
    %c0_i32_1 = arith.constant 0 : i32
    return %c0_i32, %c0_i32_0 : i32, i32
  }
  func.func @transform_3(%arg0: i32) -> (i32, i32) {
    %c0_i32 = arith.constant 0 : i32
    %c0_i32_0 = arith.constant 0 : i32
    %c0_i32_1 = arith.constant 0 : i32
    return %c0_i32, %c0_i32_0 : i32, i32
  }
  func.func @transform_4(%arg0: i32) -> (i32, i32) {
    %c0_i32 = arith.constant 0 : i32
    %c0_i32_0 = arith.constant 0 : i32
    %c0_i32_1 = arith.constant 0 : i32
    return %c0_i32, %c0_i32_0 : i32, i32
  }
  func.func @transform_5(%arg0: i32) -> (i32, i32) {
    %c0_i32 = arith.constant 0 : i32
    %c0_i32_0 = arith.constant 0 : i32
    %c0_i32_1 = arith.constant 0 : i32
    return %c0_i32, %c0_i32_0 : i32, i32
  }
  func.func @transform_6(%arg0: i32) -> (i32, i32) {
    %c0_i32 = arith.constant 0 : i32
    %c0_i32_0 = arith.constant 0 : i32
    %c0_i32_1 = arith.constant 0 : i32
    return %c0_i32, %c0_i32_0 : i32, i32
  }
  func.func @transform_7(%arg0: i32) -> (i32, i32) {
    %c0_i32 = arith.constant 0 : i32
    %c0_i32_0 = arith.constant 0 : i32
    return %c0_i32, %arg0 : i32, i32
  }
}

</mosaic_0001>

<llo_original>
// kernel: tpu_custom_call.1
$region0: #{tpu_custom_call.1}
  #allocation0 [shape = 'u32[]', space=smem, size = 0x4, offset = 0x4, fixed_abs, tag = 'smem constant byte address 0x4 - core index']
  #allocation1 [shape = 'u32[144,128]{1,0:T(1,128)}', space=vmem, size = 0x12000, scoped, tag = 'internal scratch']
  %s0 = inlined_call_operand.vmem [shape: f32[8,512], index: 0, kind: input, shape index: {}]
  %s1 = inlined_call_operand.vmem [shape: f32[200,8], index: 1, kind: input, shape index: {}]
  %s2 = inlined_call_operand.vmem [shape: f32[200,1], index: 2, kind: input, shape index: {}]
  %s3 = inlined_call_operand.vmem [shape: bf16[50,200], index: 3, kind: input, shape index: {}]
  %s4 = inlined_call_operand.vmem [shape: f32[50,1], index: 4, kind: input, shape index: {}]
  %s5 = inlined_call_operand.vmem [shape: bf16[3,50], index: 5, kind: input, shape index: {}]
  %s6 = inlined_call_operand.vmem [shape: f32[3,1], index: 6, kind: input, shape index: {}]
  %s7 = inlined_call_operand.hbm [shape: f32[3,512], index: 7, kind: output, shape index: {}]
  %s8 = sld [smem:[#allocation0]]
  $region38: #{tpu_custom_call.1} parent=0
    _
  %s10 = ssub.s32 1, %s8
  %s11 = scalar_select 0, %s10, %s8
  $region1: #{tpu_custom_call.1} parent=0
    #allocation2 [shape = 'u8[8192]{0}', space=vmem, size = 0x2000, scoped, tag = 'output window, operand 0, single buffered']
    #allocation3 [shape = 's32[1]{0}', space=sflag, size = 0x4, scoped, tag = 'scoped memory for tpu_custom_call.1']
    %12 = vsyncpa [#allocation3], 0
    // Predicated region
    $region2: #{tpu_custom_call.1} parent=1 // pred_check
      _
    $region3: #{tpu_custom_call.1} parent=1 // pred_check_branch
      %14 = sbr.rel (0) target = $region5
    $region4: #{tpu_custom_call.1} parent=1 // pred_region
      _
    $region5: #{tpu_custom_call.1} parent=1 // pred_fallthru
      _
    // Predicated region
    $region6: #{tpu_custom_call.1} parent=1 // pred_check
      _
    $region7: #{tpu_custom_call.1} parent=1 // pred_check_branch
      %16 = sbr.rel (0) target = $region9
    $region8: #{tpu_custom_call.1} parent=1 // pred_region
      _
    $region9: #{tpu_custom_call.1} parent=1 // pred_fallthru
      _
    // Predicated region
    $region10: #{tpu_custom_call.1} parent=1 // pred_check
      _
    $region11: #{tpu_custom_call.1} parent=1 // pred_check_branch
      %18 = sbr.rel (0) target = $region13
    $region12: #{tpu_custom_call.1} parent=1 // pred_region
      _
    $region13: #{tpu_custom_call.1} parent=1 // pred_fallthru
      _
    // Predicated region
    $region14: #{tpu_custom_call.1} parent=1 // pred_check
      _
    $region15: #{tpu_custom_call.1} parent=1 // pred_check_branch
      %20 = sbr.rel (0) target = $region17
    $region16: #{tpu_custom_call.1} parent=1 // pred_region
      _
    $region17: #{tpu_custom_call.1} parent=1 // pred_fallthru
      _
    // Predicated region
    $region18: #{tpu_custom_call.1} parent=1 // pred_check
      _
    $region19: #{tpu_custom_call.1} parent=1 // pred_check_branch
      %22 = sbr.rel (0) target = $region21
    $region20: #{tpu_custom_call.1} parent=1 // pred_region
      _
    $region21: #{tpu_custom_call.1} parent=1 // pred_fallthru
      _
    // Predicated region
    $region22: #{tpu_custom_call.1} parent=1 // pred_check
      _
    $region23: #{tpu_custom_call.1} parent=1 // pred_check_branch
      %24 = sbr.rel (0) target = $region25
    $region24: #{tpu_custom_call.1} parent=1 // pred_region
      _
    $region25: #{tpu_custom_call.1} parent=1 // pred_fallthru
      _
    // Predicated region
    $region26: #{tpu_custom_call.1} parent=1 // pred_check
      _
    $region27: #{tpu_custom_call.1} parent=1 // pred_check_branch
      %26 = sbr.rel (0) target = $region29
    $region28: #{tpu_custom_call.1} parent=1 // pred_region
      _
    $region29: #{tpu_custom_call.1} parent=1 // pred_fallthru
      _
    %v28 = vld [vmem:[%s0] sm:$0xff]
    %v29 = vld [vmem:[%s0 + $0x8] sm:$0xff]
    %v30 = vld [vmem:[%s0 + $0x10] sm:$0xff]
    %v31 = vld [vmem:[%s0 + $0x18] sm:$0xff]
    %v32 = vld [vmem:[%s1] sm:$0xff]
    %v33 = vld [vmem:[%s1 + $0x8] sm:$0xff]
    %v34 = vld [vmem:[%s1 + $0x10] sm:$0xff]
    %v35 = vld [vmem:[%s1 + $0x18] sm:$0xff]
    %v36 = vld [vmem:[%s1 + $0x20] sm:$0xff]
    %v37 = vld [vmem:[%s1 + $0x28] sm:$0xff]
    %v38 = vld [vmem:[%s1 + $0x30] sm:$0xff]
    %v39 = vld [vmem:[%s1 + $0x38] sm:$0xff]
    %v40 = vld [vmem:[%s1 + $0x40] sm:$0xff]
    %v41 = vld [vmem:[%s1 + $0x48] sm:$0xff]
    %v42 = vld [vmem:[%s1 + $0x50] sm:$0xff]
    %v43 = vld [vmem:[%s1 + $0x58] sm:$0xff]
    %v44 = vld [vmem:[%s1 + $0x60] sm:$0xff]
    %v45 = vld [vmem:[%s1 + $0x68] sm:$0xff]
    %v46 = vld [vmem:[%s1 + $0x70] sm:$0xff]
    %v47 = vld [vmem:[%s1 + $0x78] sm:$0xff]
    %v48 = vld [vmem:[%s1 + $0x80] sm:$0xff]
    %v49 = vld [vmem:[%s1 + $0x88] sm:$0xff]
    %v50 = vld [vmem:[%s1 + $0x90] sm:$0xff]
    %v51 = vld [vmem:[%s1 + $0x98] sm:$0xff]
    %v52 = vld [vmem:[%s1 + $0xa0] sm:$0xff]
    %v53 = vld [vmem:[%s1 + $0xa8] sm:$0xff]
    %v54 = vld [vmem:[%s1 + $0xb0] sm:$0xff]
    %v55 = vld [vmem:[%s1 + $0xb8] sm:$0xff]
    %v56 = vld [vmem:[%s1 + $0xc0] sm:$0xff]
    %v57 = vld [vmem:[%s2] sm:$0xff]
    %v58 = vld [vmem:[%s2 + $0x8] sm:$0xff]
    %v59 = vld [vmem:[%s2 + $0x10] sm:$0xff]
    %v60 = vld [vmem:[%s2 + $0x18] sm:$0xff]
    %v61 = vld [vmem:[%s2 + $0x20] sm:$0xff]
    %v62 = vld [vmem:[%s2 + $0x28] sm:$0xff]
    %v63 = vld [vmem:[%s2 + $0x30] sm:$0xff]
    %v64 = vld [vmem:[%s2 + $0x38] sm:$0xff]
    %v65 = vld [vmem:[%s2 + $0x40] sm:$0xff]
    %v66 = vld [vmem:[%s2 + $0x48] sm:$0xff]
    %v67 = vld [vmem:[%s2 + $0x50] sm:$0xff]
    %v68 = vld [vmem:[%s2 + $0x58] sm:$0xff]
    %v69 = vld [vmem:[%s2 + $0x60] sm:$0xff]
    %v70 = vld [vmem:[%s2 + $0x68] sm:$0xff]
    %v71 = vld [vmem:[%s2 + $0x70] sm:$0xff]
    %v72 = vld [vmem:[%s2 + $0x78] sm:$0xff]
    %v73 = vld [vmem:[%s2 + $0x80] sm:$0xff]
    %v74 = vld [vmem:[%s2 + $0x88] sm:$0xff]
    %v75 = vld [vmem:[%s2 + $0x90] sm:$0xff]
    %v76 = vld [vmem:[%s2 + $0x98] sm:$0xff]
    %v77 = vld [vmem:[%s2 + $0xa0] sm:$0xff]
    %v78 = vld [vmem:[%s2 + $0xa8] sm:$0xff]
    %v79 = vld [vmem:[%s2 + $0xb0] sm:$0xff]
    %v80 = vld [vmem:[%s2 + $0xb8] sm:$0xff]
    %v81 = vld [vmem:[%s2 + $0xc0] sm:$0xff]
    %83 = vset.pattern.permute.xlu0 0
    %84 = vperm.xlu0 %83, %v57
    %v85 = vpop.permute.xlu0 %84
    %88 = vset.pattern.permute.xlu0 0
    %89 = vperm.xlu0 %88, %v58
    %v90 = vpop.permute.xlu0 %89
    %93 = vset.pattern.permute.xlu0 0
    %94 = vperm.xlu0 %93, %v59
    %v95 = vpop.permute.xlu0 %94
    %98 = vset.pattern.permute.xlu0 0
    %99 = vperm.xlu0 %98, %v60
    %v100 = vpop.permute.xlu0 %99
    %103 = vset.pattern.permute.xlu0 0
    %104 = vperm.xlu0 %103, %v61
    %v105 = vpop.permute.xlu0 %104
    %108 = vset.pattern.permute.xlu0 0
    %109 = vperm.xlu0 %108, %v62
    %v110 = vpop.permute.xlu0 %109
    %113 = vset.pattern.permute.xlu0 0
    %114 = vperm.xlu0 %113, %v63
    %v115 = vpop.permute.xlu0 %114
    %118 = vset.pattern.permute.xlu0 0
    %119 = vperm.xlu0 %118, %v64
    %v120 = vpop.permute.xlu0 %119
    %123 = vset.pattern.permute.xlu0 0
    %124 = vperm.xlu0 %123, %v65
    %v125 = vpop.permute.xlu0 %124
    %128 = vset.pattern.permute.xlu0 0
    %129 = vperm.xlu0 %128, %v66
    %v130 = vpop.permute.xlu0 %129
    %133 = vset.pattern.permute.xlu0 0
    %134 = vperm.xlu0 %133, %v67
    %v135 = vpop.permute.xlu0 %134
    %138 = vset.pattern.permute.xlu0 0
    %139 = vperm.xlu0 %138, %v68
    %v140 = vpop.permute.xlu0 %139
    %143 = vset.pattern.permute.xlu0 0
    %144 = vperm.xlu0 %143, %v69
    %v145 = vpop.permute.xlu0 %144
    %148 = vset.pattern.permute.xlu0 0
    %149 = vperm.xlu0 %148, %v70
    %v150 = vpop.permute.xlu0 %149
    %153 = vset.pattern.permute.xlu0 0
    %154 = vperm.xlu0 %153, %v71
    %v155 = vpop.permute.xlu0 %154
    %158 = vset.pattern.permute.xlu0 0
    %159 = vperm.xlu0 %158, %v72
    %v160 = vpop.permute.xlu0 %159
    %163 = vset.pattern.permute.xlu0 0
    %164 = vperm.xlu0 %163, %v73
    %v165 = vpop.permute.xlu0 %164
    %168 = vset.pattern.permute.xlu0 0
    %169 = vperm.xlu0 %168, %v74
    %v170 = vpop.permute.xlu0 %169
    %173 = vset.pattern.permute.xlu0 0
    %174 = vperm.xlu0 %173, %v75
    %v175 = vpop.permute.xlu0 %174
    %178 = vset.pattern.permute.xlu0 0
    %179 = vperm.xlu0 %178, %v76
    %v180 = vpop.permute.xlu0 %179
    %183 = vset.pattern.permute.xlu0 0
    %184 = vperm.xlu0 %183, %v77
    %v185 = vpop.permute.xlu0 %184
    %188 = vset.pattern.permute.xlu0 0
    %189 = vperm.xlu0 %188, %v78
    %v190 = vpop.permute.xlu0 %189
    %193 = vset.pattern.permute.xlu0 0
    %194 = vperm.xlu0 %193, %v79
    %v195 = vpop.permute.xlu0 %194
    %198 = vset.pattern.permute.xlu0 0
    %199 = vperm.xlu0 %198, %v80
    %v200 = vpop.permute.xlu0 %199
    %203 = vset.pattern.permute.xlu0 0
    %204 = vperm.xlu0 %203, %v81
    %v205 = vpop.permute.xlu0 %204
    %vm207 = vcmask 64512
    %v209 = vsel %vm207, %v32, 0
    %v212 = vsel %vm207, %v33, 0
    %v215 = vsel %vm207, %v34, 0
    %v218 = vsel %vm207, %v35, 0
    %v221 = vsel %vm207, %v36, 0
    %v224 = vsel %vm207, %v37, 0
    %v227 = vsel %vm207, %v38, 0
    %v230 = vsel %vm207, %v39, 0
    %v233 = vsel %vm207, %v40, 0
    %v236 = vsel %vm207, %v41, 0
    %v239 = vsel %vm207, %v42, 0
    %v242 = vsel %vm207, %v43, 0
    %v245 = vsel %vm207, %v44, 0
    %v248 = vsel %vm207, %v45, 0
    %v251 = vsel %vm207, %v46, 0
    %v254 = vsel %vm207, %v47, 0
    %v257 = vsel %vm207, %v48, 0
    %v260 = vsel %vm207, %v49, 0
    %v263 = vsel %vm207, %v50, 0
    %v266 = vsel %vm207, %v51, 0
    %v269 = vsel %vm207, %v52, 0
    %v272 = vsel %vm207, %v53, 0
    %v275 = vsel %vm207, %v54, 0
    %v278 = vsel %vm207, %v55, 0
    %v281 = vsel %vm207, %v56, 0
    %283 = vmatprep.subr.mxu0 %v29
    %284 = vmatpush1.msra.mxu0 %v28
    %285 = vmatprep.subr.mxu0 0.0
    %286 = vmatpush1.msra.mxu0 0.0
    %287 = vmatprep.subr.mxu0 0.0
    %288 = vmatpush1.msra.mxu0 0.0
    %289 = vmatprep.subr.mxu0 0.0
    %290 = vmatpush1.msra.mxu0 0.0
    %291 = vmatprep.subr.mxu0 0.0
    %292 = vmatpush1.msra.mxu0 0.0
    %293 = vmatprep.subr.mxu0 0.0
    %294 = vmatpush1.msra.mxu0 0.0
    %295 = vmatprep.subr.mxu0 0.0
    %296 = vmatpush1.msra.mxu0 0.0
    %297 = vmatprep.subr.mxu0 0.0
    %298 = vmatpush1.msra.mxu0 0.0
    %299 = vmatprep.subr.mxu0 0.0
    %300 = vmatpush1.msra.mxu0 0.0
    %301 = vmatprep.subr.mxu0 0.0
    %302 = vmatpush1.msra.mxu0 0.0
    %303 = vmatprep.subr.mxu0 0.0
    %304 = vmatpush1.msra.mxu0 0.0
    %305 = vmatprep.subr.mxu0 0.0
    %306 = vmatpush1.msra.mxu0 0.0
    %307 = vmatprep.subr.mxu0 0.0
    %308 = vmatpush1.msra.mxu0 0.0
    %309 = vmatprep.subr.mxu0 0.0
    %310 = vmatpush1.msra.mxu0 0.0
    %311 = vmatprep.subr.mxu0 0.0
    %312 = vmatpush1.msra.mxu0 0.0
    %313 = vmatprep.subr.mxu0 0.0
    %314 = vmatpush1.msra.mxu0 0.0
    %315 = vmatprep.subr.mxu0 0.0
    %316 = vmatpush1.msra.mxu0 0.0
    %317 = vmatprep.subr.mxu0 0.0
    %318 = vmatpush1.msra.mxu0 0.0
    %319 = vmatprep.subr.mxu0 0.0
    %320 = vmatpush1.msra.mxu0 0.0
    %321 = vmatprep.subr.mxu0 0.0
    %322 = vmatpush1.msra.mxu0 0.0
    %323 = vmatprep.subr.mxu0 0.0
    %324 = vmatpush1.msra.mxu0 0.0
    %325 = vmatprep.subr.mxu0 0.0
    %326 = vmatpush1.msra.mxu0 0.0
    %327 = vmatprep.subr.mxu0 0.0
    %328 = vmatpush1.msra.mxu0 0.0
    %329 = vmatprep.subr.mxu0 0.0
    %330 = vmatpush1.msra.mxu0 0.0
    %331 = vmatprep.subr.mxu0 0.0
    %332 = vmatpush1.msra.mxu0 0.0
    %333 = vmatprep.subr.mxu0 0.0
    %334 = vmatpush1.msra.mxu0 0.0
    %335 = vmatprep.subr.mxu0 0.0
    %336 = vmatpush1.msra.mxu0 0.0
    %337 = vmatprep.subr.mxu0 0.0
    %338 = vmatpush1.msra.mxu0 0.0
    %339 = vmatprep.subr.mxu0 0.0
    %340 = vmatpush1.msra.mxu0 0.0
    %341 = vmatprep.subr.mxu0 0.0
    %342 = vmatpush1.msra.mxu0 0.0
    %343 = vmatprep.subr.mxu0 0.0
    %344 = vmatpush1.msra.mxu0 0.0
    %345 = vmatprep.subr.mxu0 0.0
    %346 = vmatpush1.msra.mxu0 0.0
    %347 = vmatprep.mubr.f32.mxu0 0.0
    %348 = vmatmul.mubr.f32.gmra.mrb[0].mxu0 %v209
    %v349 = vpop.f32.mrb[0].mxu0
    %v350 = vadd.f32 %v85, %v349
    %v351 = vpop.f32.mrb[0].mxu0
    %v352 = vadd.f32 %v85, %v351
    %353 = vmatprep.mubr.f32.mxu0 0.0
    %354 = vmatmul.mubr.f32.gmra.mrb[0].mxu0 %v212
    %v355 = vpop.f32.mrb[0].mxu0
    %v356 = vadd.f32 %v90, %v355
    %v357 = vpop.f32.mrb[0].mxu0
    %v358 = vadd.f32 %v90, %v357
    %359 = vmatprep.mubr.f32.mxu0 0.0
    %360 = vmatmul.mubr.f32.gmra.mrb[0].mxu0 %v215
    %v361 = vpop.f32.mrb[0].mxu0
    %v362 = vadd.f32 %v95, %v361
    %v363 = vpop.f32.mrb[0].mxu0
    %v364 = vadd.f32 %v95, %v363
    %365 = vmatprep.mubr.f32.mxu0 0.0
    %366 = vmatmul.mubr.f32.gmra.mrb[0].mxu0 %v218
    %v367 = vpop.f32.mrb[0].mxu0
    %v368 = vadd.f32 %v100, %v367
    %v369 = vpop.f32.mrb[0].mxu0
    %v370 = vadd.f32 %v100, %v369
    %371 = vmatprep.mubr.f32.mxu0 0.0
    %372 = vmatmul.mubr.f32.gmra.mrb[0].mxu0 %v221
    %v373 = vpop.f32.mrb[0].mxu0
    %v374 = vadd.f32 %v105, %v373
    %v375 = vpop.f32.mrb[0].mxu0
    %v376 = vadd.f32 %v105, %v375
    %377 = vmatprep.mubr.f32.mxu0 0.0
    %378 = vmatmul.mubr.f32.gmra.mrb[0].mxu0 %v224
    %v379 = vpop.f32.mrb[0].mxu0
    %v380 = vadd.f32 %v110, %v379
    %v381 = vpop.f32.mrb[0].mxu0
    %v382 = vadd.f32 %v110, %v381
    %383 = vmatprep.mubr.f32.mxu0 0.0
    %384 = vmatmul.mubr.f32.gmra.mrb[0].mxu0 %v227
    %v385 = vpop.f32.mrb[0].mxu0
    %v386 = vadd.f32 %v115, %v385
    %v387 = vpop.f32.mrb[0].mxu0
    %v388 = vadd.f32 %v115, %v387
    %389 = vmatprep.mubr.f32.mxu0 0.0
    %390 = vmatmul.mubr.f32.gmra.mrb[0].mxu0 %v230
    %v391 = vpop.f32.mrb[0].mxu0
    %v392 = vadd.f32 %v120, %v391
    %v393 = vpop.f32.mrb[0].mxu0
    %v394 = vadd.f32 %v120, %v393
    %395 = vmatprep.mubr.f32.mxu0 0.0
    %396 = vmatmul.mubr.f32.gmra.mrb[0].mxu0 %v233
    %v397 = vpop.f32.mrb[0].mxu0
    %v398 = vadd.f32 %v125, %v397
    %v399 = vpop.f32.mrb[0].mxu0
    %v400 = vadd.f32 %v125, %v399
    %401 = vmatprep.mubr.f32.mxu0 0.0
    %402 = vmatmul.mubr.f32.gmra.mrb[0].mxu0 %v236
    %v403 = vpop.f32.mrb[0].mxu0
    %v404 = vadd.f32 %v130, %v403
    %v405 = vpop.f32.mrb[0].mxu0
    %v406 = vadd.f32 %v130, %v405
    %407 = vmatprep.mubr.f32.mxu0 0.0
    %408 = vmatmul.mubr.f32.gmra.mrb[0].mxu0 %v239
    %v409 = vpop.f32.mrb[0].mxu0
    %v410 = vadd.f32 %v135, %v409
    %v411 = vpop.f32.mrb[0].mxu0
    %v412 = vadd.f32 %v135, %v411
    %413 = vmatprep.mubr.f32.mxu0 0.0
    %414 = vmatmul.mubr.f32.gmra.mrb[0].mxu0 %v242
    %v415 = vpop.f32.mrb[0].mxu0
    %v416 = vadd.f32 %v140, %v415
    %v417 = vpop.f32.mrb[0].mxu0
    %v418 = vadd.f32 %v140, %v417
    %419 = vmatprep.mubr.f32.mxu0 0.0
    %420 = vmatmul.mubr.f32.gmra.mrb[0].mxu0 %v245
    %v421 = vpop.f32.mrb[0].mxu0
    %v422 = vadd.f32 %v145, %v421
    %v423 = vpop.f32.mrb[0].mxu0
    %v424 = vadd.f32 %v145, %v423
    %425 = vmatprep.mubr.f32.mxu0 0.0
    %426 = vmatmul.mubr.f32.gmra.mrb[0].mxu0 %v248
    %v427 = vpop.f32.mrb[0].mxu0
    %v428 = vadd.f32 %v150, %v427
    %v429 = vpop.f32.mrb[0].mxu0
    %v430 = vadd.f32 %v150, %v429
    %431 = vmatprep.mubr.f32.mxu0 0.0
    %432 = vmatmul.mubr.f32.gmra.mrb[0].mxu0 %v251
    %v433 = vpop.f32.mrb[0].mxu0
    %v434 = vadd.f32 %v155, %v433
    %v435 = vpop.f32.mrb[0].mxu0
    %v436 = vadd.f32 %v155, %v435
    %437 = vmatprep.mubr.f32.mxu0 0.0
    %438 = vmatmul.mubr.f32.gmra.mrb[0].mxu0 %v254
    %v439 = vpop.f32.mrb[0].mxu0
    %v440 = vadd.f32 %v160, %v439
    %v441 = vpop.f32.mrb[0].mxu0
    %v442 = vadd.f32 %v160, %v441
    %443 = vmatprep.mubr.f32.mxu0 0.0
    %444 = vmatmul.mubr.f32.gmra.mrb[0].mxu0 %v257
    %v445 = vpop.f32.mrb[0].mxu0
    %v446 = vadd.f32 %v165, %v445
    %v447 = vpop.f32.mrb[0].mxu0
    %v448 = vadd.f32 %v165, %v447
    %449 = vmatprep.mubr.f32.mxu0 0.0
    %450 = vmatmul.mubr.f32.gmra.mrb[0].mxu0 %v260
    %v451 = vpop.f32.mrb[0].mxu0
    %v452 = vadd.f32 %v170, %v451
    %v453 = vpop.f32.mrb[0].mxu0
    %v454 = vadd.f32 %v170, %v453
    %455 = vmatprep.mubr.f32.mxu0 0.0
    %456 = vmatmul.mubr.f32.gmra.mrb[0].mxu0 %v263
    %v457 = vpop.f32.mrb[0].mxu0
    %v458 = vadd.f32 %v175, %v457
    %v459 = vpop.f32.mrb[0].mxu0
    %v460 = vadd.f32 %v175, %v459
    %461 = vmatprep.mubr.f32.mxu0 0.0
    %462 = vmatmul.mubr.f32.gmra.mrb[0].mxu0 %v266
    %v463 = vpop.f32.mrb[0].mxu0
    %v464 = vadd.f32 %v180, %v463
    %v465 = vpop.f32.mrb[0].mxu0
    %v466 = vadd.f32 %v180, %v465
    %467 = vmatprep.mubr.f32.mxu0 0.0
    %468 = vmatmul.mubr.f32.gmra.mrb[0].mxu0 %v269
    %v469 = vpop.f32.mrb[0].mxu0
    %v470 = vadd.f32 %v185, %v469
    %v471 = vpop.f32.mrb[0].mxu0
    %v472 = vadd.f32 %v185, %v471
    %473 = vmatprep.mubr.f32.mxu0 0.0
    %474 = vmatmul.mubr.f32.gmra.mrb[0].mxu0 %v272
    %v475 = vpop.f32.mrb[0].mxu0
    %v476 = vadd.f32 %v190, %v475
    %v477 = vpop.f32.mrb[0].mxu0
    %v478 = vadd.f32 %v190, %v477
    %479 = vmatprep.mubr.f32.mxu0 0.0
    %480 = vmatmul.mubr.f32.gmra.mrb[0].mxu0 %v275
    %v481 = vpop.f32.mrb[0].mxu0
    %v482 = vadd.f32 %v195, %v481
    %v483 = vpop.f32.mrb[0].mxu0
    %v484 = vadd.f32 %v195, %v483
    %485 = vmatprep.mubr.f32.mxu0 0.0
    %486 = vmatmul.mubr.f32.gmra.mrb[0].mxu0 %v278
    %v487 = vpop.f32.mrb[0].mxu0
    %v488 = vadd.f32 %v200, %v487
    %v489 = vpop.f32.mrb[0].mxu0
    %v490 = vadd.f32 %v200, %v489
    %491 = vmatprep.mubr.f32.mxu0 0.0
    %492 = vmatmul.mubr.f32.gmra.mrb[0].mxu0 %v281
    %v493 = vpop.f32.mrb[0].mxu0
    %v494 = vadd.f32 %v205, %v493
    %v495 = vpop.f32.mrb[0].mxu0
    %v496 = vadd.f32 %v205, %v495
    %497 = vdwg.mxu0
    %498 = vmatprep.subr.mxu0 %v31
    %499 = vmatpush1.msra.mxu0 %v30
    %500 = vmatprep.subr.mxu0 0.0
    %501 = vmatpush1.msra.mxu0 0.0
    %502 = vmatprep.subr.mxu0 0.0
    %503 = vmatpush1.msra.mxu0 0.0
    %504 = vmatprep.subr.mxu0 0.0
    %505 = vmatpush1.msra.mxu0 0.0
    %506 = vmatprep.subr.mxu0 0.0
    %507 = vmatpush1.msra.mxu0 0.0
    %508 = vmatprep.subr.mxu0 0.0
    %509 = vmatpush1.msra.mxu0 0.0
    %510 = vmatprep.subr.mxu0 0.0
    %511 = vmatpush1.msra.mxu0 0.0
    %512 = vmatprep.subr.mxu0 0.0
    %513 = vmatpush1.msra.mxu0 0.0
    %514 = vmatprep.subr.mxu0 0.0
    %515 = vmatpush1.msra.mxu0 0.0
    %516 = vmatprep.subr.mxu0 0.0
    %517 = vmatpush1.msra.mxu0 0.0
    %518 = vmatprep.subr.mxu0 0.0
    %519 = vmatpush1.msra.mxu0 0.0
    %520 = vmatprep.subr.mxu0 0.0
    %521 = vmatpush1.msra.mxu0 0.0
    %522 = vmatprep.subr.mxu0 0.0
    %523 = vmatpush1.msra.mxu0 0.0
    %524 = vmatprep.subr.mxu0 0.0
    %525 = vmatpush1.msra.mxu0 0.0
    %526 = vmatprep.subr.mxu0 0.0
    %527 = vmatpush1.msra.mxu0 0.0
    %528 = vmatprep.subr.mxu0 0.0
    %529 = vmatpush1.msra.mxu0 0.0
    %530 = vmatprep.subr.mxu0 0.0
    %531 = vmatpush1.msra.mxu0 0.0
    %532 = vmatprep.subr.mxu0 0.0
    %533 = vmatpush1.msra.mxu0 0.0
    %534 = vmatprep.subr.mxu0 0.0
    %535 = vmatpush1.msra.mxu0 0.0
    %536 = vmatprep.subr.mxu0 0.0
    %537 = vmatpush1.msra.mxu0 0.0
    %538 = vmatprep.subr.mxu0 0.0
    %539 = vmatpush1.msra.mxu0 0.0
    %540 = vmatprep.subr.mxu0 0.0
    %541 = vmatpush1.msra.mxu0 0.0
    %542 = vmatprep.subr.mxu0 0.0
    %543 = vmatpush1.msra.mxu0 0.0
    %544 = vmatprep.subr.mxu0 0.0
    %545 = vmatpush1.msra.mxu0 0.0
    %546 = vmatprep.subr.mxu0 0.0
    %547 = vmatpush1.msra.mxu0 0.0
    %548 = vmatprep.subr.mxu0 0.0
    %549 = vmatpush1.msra.mxu0 0.0
    %550 = vmatprep.subr.mxu0 0.0
    %551 = vmatpush1.msra.mxu0 0.0
    %552 = vmatprep.subr.mxu0 0.0
    %553 = vmatpush1.msra.mxu0 0.0
    %554 = vmatprep.subr.mxu0 0.0
    %555 = vmatpush1.msra.mxu0 0.0
    %556 = vmatprep.subr.mxu0 0.0
    %557 = vmatpush1.msra.mxu0 0.0
    %558 = vmatprep.subr.mxu0 0.0
    %559 = vmatpush1.msra.mxu0 0.0
    %560 = vmatprep.subr.mxu0 0.0
    %561 = vmatpush1.msra.mxu0 0.0
    %562 = vmatprep.mubr.f32.mxu0 0.0
    %563 = vmatmul.mubr.f32.gmra.mrb[0].mxu0 %v209
    %v564 = vpop.f32.mrb[0].mxu0
    %v565 = vadd.f32 %v85, %v564
    %v566 = vpop.f32.mrb[0].mxu0
    %v567 = vadd.f32 %v85, %v566
    %568 = vmatprep.mubr.f32.mxu0 0.0
    %569 = vmatmul.mubr.f32.gmra.mrb[0].mxu0 %v212
    %v570 = vpop.f32.mrb[0].mxu0
    %v571 = vadd.f32 %v90, %v570
    %v572 = vpop.f32.mrb[0].mxu0
    %v573 = vadd.f32 %v90, %v572
    %574 = vmatprep.mubr.f32.mxu0 0.0
    %575 = vmatmul.mubr.f32.gmra.mrb[0].mxu0 %v215
    %v576 = vpop.f32.mrb[0].mxu0
    %v577 = vadd.f32 %v95, %v576
    %v578 = vpop.f32.mrb[0].mxu0
    %v579 = vadd.f32 %v95, %v578
    %580 = vmatprep.mubr.f32.mxu0 0.0
    %581 = vmatmul.mubr.f32.gmra.mrb[0].mxu0 %v218
    %v582 = vpop.f32.mrb[0].mxu0
    %v583 = vadd.f32 %v100, %v582
    %v584 = vpop.f32.mrb[0].mxu0
    %v585 = vadd.f32 %v100, %v584
    %586 = vmatprep.mubr.f32.mxu0 0.0
    %587 = vmatmul.mubr.f32.gmra.mrb[0].mxu0 %v221
    %v588 = vpop.f32.mrb[0].mxu0
    %v589 = vadd.f32 %v105, %v588
    %v590 = vpop.f32.mrb[0].mxu0
    %v591 = vadd.f32 %v105, %v590
    %592 = vmatprep.mubr.f32.mxu0 0.0
    %593 = vmatmul.mubr.f32.gmra.mrb[0].mxu0 %v224
    %v594 = vpop.f32.mrb[0].mxu0
    %v595 = vadd.f32 %v110, %v594
    %v596 = vpop.f32.mrb[0].mxu0
    %v597 = vadd.f32 %v110, %v596
    %598 = vmatprep.mubr.f32.mxu0 0.0
    %599 = vmatmul.mubr.f32.gmra.mrb[0].mxu0 %v227
    %v600 = vpop.f32.mrb[0].mxu0
    %v601 = vadd.f32 %v115, %v600
    %v602 = vpop.f32.mrb[0].mxu0
    %v603 = vadd.f32 %v115, %v602
    %604 = vmatprep.mubr.f32.mxu0 0.0
    %605 = vmatmul.mubr.f32.gmra.mrb[0].mxu0 %v230
    %v606 = vpop.f32.mrb[0].mxu0
    %v607 = vadd.f32 %v120, %v606
    %v608 = vpop.f32.mrb[0].mxu0
    %v609 = vadd.f32 %v120, %v608
    %610 = vmatprep.mubr.f32.mxu0 0.0
    %611 = vmatmul.mubr.f32.gmra.mrb[0].mxu0 %v233
    %v612 = vpop.f32.mrb[0].mxu0
    %v613 = vadd.f32 %v125, %v612
    %v614 = vpop.f32.mrb[0].mxu0
    %v615 = vadd.f32 %v125, %v614
    %616 = vmatprep.mubr.f32.mxu0 0.0
    %617 = vmatmul.mubr.f32.gmra.mrb[0].mxu0 %v236
    %v618 = vpop.f32.mrb[0].mxu0
    %v619 = vadd.f32 %v130, %v618
    %v620 = vpop.f32.mrb[0].mxu0
    %v621 = vadd.f32 %v130, %v620
    %622 = vmatprep.mubr.f32.mxu0 0.0
    %623 = vmatmul.mubr.f32.gmra.mrb[0].mxu0 %v239
    %v624 = vpop.f32.mrb[0].mxu0
    %v625 = vadd.f32 %v135, %v624
    %v626 = vpop.f32.mrb[0].mxu0
    %v627 = vadd.f32 %v135, %v626
    %628 = vmatprep.mubr.f32.mxu0 0.0
    %629 = vmatmul.mubr.f32.gmra.mrb[0].mxu0 %v242
    %v630 = vpop.f32.mrb[0].mxu0
    %v631 = vadd.f32 %v140, %v630
    %v632 = vpop.f32.mrb[0].mxu0
    %v633 = vadd.f32 %v140, %v632
    %634 = vmatprep.mubr.f32.mxu0 0.0
    %635 = vmatmul.mubr.f32.gmra.mrb[0].mxu0 %v245
    %v636 = vpop.f32.mrb[0].mxu0
    %v637 = vadd.f32 %v145, %v636
    %v638 = vpop.f32.mrb[0].mxu0
    %v639 = vadd.f32 %v145, %v638
    %640 = vmatprep.mubr.f32.mxu0 0.0
    %641 = vmatmul.mubr.f32.gmra.mrb[0].mxu0 %v248
    %v642 = vpop.f32.mrb[0].mxu0
    %v643 = vadd.f32 %v150, %v642
    %v644 = vpop.f32.mrb[0].mxu0
    %v645 = vadd.f32 %v150, %v644
    %646 = vmatprep.mubr.f32.mxu0 0.0
    %647 = vmatmul.mubr.f32.gmra.mrb[0].mxu0 %v251
    %v648 = vpop.f32.mrb[0].mxu0
    %v649 = vadd.f32 %v155, %v648
    %v650 = vpop.f32.mrb[0].mxu0
    %v651 = vadd.f32 %v155, %v650
    %652 = vmatprep.mubr.f32.mxu0 0.0
    %653 = vmatmul.mubr.f32.gmra.mrb[0].mxu0 %v254
    %v654 = vpop.f32.mrb[0].mxu0
    %v655 = vadd.f32 %v160, %v654
    %v656 = vpop.f32.mrb[0].mxu0
    %v657 = vadd.f32 %v160, %v656
    %658 = vmatprep.mubr.f32.mxu0 0.0
    %659 = vmatmul.mubr.f32.gmra.mrb[0].mxu0 %v257
    %v660 = vpop.f32.mrb[0].mxu0
    %v661 = vadd.f32 %v165, %v660
    %v662 = vpop.f32.mrb[0].mxu0
    %v663 = vadd.f32 %v165, %v662
    %664 = vmatprep.mubr.f32.mxu0 0.0
    %665 = vmatmul.mubr.f32.gmra.mrb[0].mxu0 %v260
    %v666 = vpop.f32.mrb[0].mxu0
    %v667 = vadd.f32 %v170, %v666
    %v668 = vpop.f32.mrb[0].mxu0
    %v669 = vadd.f32 %v170, %v668
    %670 = vmatprep.mubr.f32.mxu0 0.0
    %671 = vmatmul.mubr.f32.gmra.mrb[0].mxu0 %v263
    %v672 = vpop.f32.mrb[0].mxu0
    %v673 = vadd.f32 %v175, %v672
    %v674 = vpop.f32.mrb[0].mxu0
    %v675 = vadd.f32 %v175, %v674
    %676 = vmatprep.mubr.f32.mxu0 0.0
    %677 = vmatmul.mubr.f32.gmra.mrb[0].mxu0 %v266
    %v678 = vpop.f32.mrb[0].mxu0
    %v679 = vadd.f32 %v180, %v678
    %v680 = vpop.f32.mrb[0].mxu0
    %v681 = vadd.f32 %v180, %v680
    %682 = vmatprep.mubr.f32.mxu0 0.0
    %683 = vmatmul.mubr.f32.gmra.mrb[0].mxu0 %v269
    %v684 = vpop.f32.mrb[0].mxu0
    %v685 = vadd.f32 %v185, %v684
    %v686 = vpop.f32.mrb[0].mxu0
    %v687 = vadd.f32 %v185, %v686
    %688 = vmatprep.mubr.f32.mxu0 0.0
    %689 = vmatmul.mubr.f32.gmra.mrb[0].mxu0 %v272
    %v690 = vpop.f32.mrb[0].mxu0
    %v691 = vadd.f32 %v190, %v690
    %v692 = vpop.f32.mrb[0].mxu0
    %v693 = vadd.f32 %v190, %v692
    %694 = vmatprep.mubr.f32.mxu0 0.0
    %695 = vmatmul.mubr.f32.gmra.mrb[0].mxu0 %v275
    %v696 = vpop.f32.mrb[0].mxu0
    %v697 = vadd.f32 %v195, %v696
    %v698 = vpop.f32.mrb[0].mxu0
    %v699 = vadd.f32 %v195, %v698
    %700 = vmatprep.mubr.f32.mxu0 0.0
    %701 = vmatmul.mubr.f32.gmra.mrb[0].mxu0 %v278
    %v702 = vpop.f32.mrb[0].mxu0
    %v703 = vadd.f32 %v200, %v702
    %v704 = vpop.f32.mrb[0].mxu0
    %v705 = vadd.f32 %v200, %v704
    %706 = vmatprep.mubr.f32.mxu0 0.0
    %707 = vmatmul.mubr.f32.gmra.mrb[0].mxu0 %v281
    %v708 = vpop.f32.mrb[0].mxu0
    %v709 = vadd.f32 %v205, %v708
    %v710 = vpop.f32.mrb[0].mxu0
    %v711 = vadd.f32 %v205, %v710
    %712 = vdwg.mxu0
    %v713 = vmul.f32 %v350, 0.5
    %v714 = vmul.f32 %v352, 0.5
    %v715 = vmul.f32 %v565, 0.5
    %v716 = vmul.f32 %v567, 0.5
    %v717 = vmul.f32 %v356, 0.5
    %v718 = vmul.f32 %v358, 0.5
    %v719 = vmul.f32 %v571, 0.5
    %v720 = vmul.f32 %v573, 0.5
    %v721 = vmul.f32 %v362, 0.5
    %v722 = vmul.f32 %v364, 0.5
    %v723 = vmul.f32 %v577, 0.5
    %v724 = vmul.f32 %v579, 0.5
    %v725 = vmul.f32 %v368, 0.5
    %v726 = vmul.f32 %v370, 0.5
    %v727 = vmul.f32 %v583, 0.5
    %v728 = vmul.f32 %v585, 0.5
    %v729 = vmul.f32 %v374, 0.5
    %v730 = vmul.f32 %v376, 0.5
    %v731 = vmul.f32 %v589, 0.5
    %v732 = vmul.f32 %v591, 0.5
    %v733 = vmul.f32 %v380, 0.5
    %v734 = vmul.f32 %v382, 0.5
    %v735 = vmul.f32 %v595, 0.5
    %v736 = vmul.f32 %v597, 0.5
    %v737 = vmul.f32 %v386, 0.5
    %v738 = vmul.f32 %v388, 0.5
    %v739 = vmul.f32 %v601, 0.5
    %v740 = vmul.f32 %v603, 0.5
    %v741 = vmul.f32 %v392, 0.5
    %v742 = vmul.f32 %v394, 0.5
    %v743 = vmul.f32 %v607, 0.5
    %v744 = vmul.f32 %v609, 0.5
    %v745 = vmul.f32 %v398, 0.5
    %v746 = vmul.f32 %v400, 0.5
    %v747 = vmul.f32 %v613, 0.5
    %v748 = vmul.f32 %v615, 0.5
    %v749 = vmul.f32 %v404, 0.5
    %v750 = vmul.f32 %v406, 0.5
    %v751 = vmul.f32 %v619, 0.5
    %v752 = vmul.f32 %v621, 0.5
    %v753 = vmul.f32 %v410, 0.5
    %v754 = vmul.f32 %v412, 0.5
    %v755 = vmul.f32 %v625, 0.5
    %v756 = vmul.f32 %v627, 0.5
    %v757 = vmul.f32 %v416, 0.5
    %v758 = vmul.f32 %v418, 0.5
    %v759 = vmul.f32 %v631, 0.5
    %v760 = vmul.f32 %v633, 0.5
    %v761 = vmul.f32 %v422, 0.5
    %v762 = vmul.f32 %v424, 0.5
    %v763 = vmul.f32 %v637, 0.5
    %v764 = vmul.f32 %v639, 0.5
    %v765 = vmul.f32 %v428, 0.5
    %v766 = vmul.f32 %v430, 0.5
    %v767 = vmul.f32 %v643, 0.5
    %v768 = vmul.f32 %v645, 0.5
    %v769 = vmul.f32 %v434, 0.5
    %v770 = vmul.f32 %v436, 0.5
    %v771 = vmul.f32 %v649, 0.5
    %v772 = vmul.f32 %v651, 0.5
    %v773 = vmul.f32 %v440, 0.5
    %v774 = vmul.f32 %v442, 0.5
    %v775 = vmul.f32 %v655, 0.5
    %v776 = vmul.f32 %v657, 0.5
    %v777 = vmul.f32 %v446, 0.5
    %v778 = vmul.f32 %v448, 0.5
    %v779 = vmul.f32 %v661, 0.5
    %v780 = vmul.f32 %v663, 0.5
    %v781 = vmul.f32 %v452, 0.5
    %v782 = vmul.f32 %v454, 0.5
    %v783 = vmul.f32 %v667, 0.5
    %v784 = vmul.f32 %v669, 0.5
    %v785 = vmul.f32 %v458, 0.5
    %v786 = vmul.f32 %v460, 0.5
    %v787 = vmul.f32 %v673, 0.5
    %v788 = vmul.f32 %v675, 0.5
    %v789 = vmul.f32 %v464, 0.5
    %v790 = vmul.f32 %v466, 0.5
    %v791 = vmul.f32 %v679, 0.5
    %v792 = vmul.f32 %v681, 0.5
    %v793 = vmul.f32 %v470, 0.5
    %v794 = vmul.f32 %v472, 0.5
    %v795 = vmul.f32 %v685, 0.5
    %v796 = vmul.f32 %v687, 0.5
    %v797 = vmul.f32 %v476, 0.5
    %v798 = vmul.f32 %v478, 0.5
    %v799 = vmul.f32 %v691, 0.5
    %v800 = vmul.f32 %v693, 0.5
    %v801 = vmul.f32 %v482, 0.5
    %v802 = vmul.f32 %v484, 0.5
    %v803 = vmul.f32 %v697, 0.5
    %v804 = vmul.f32 %v699, 0.5
    %v805 = vmul.f32 %v488, 0.5
    %v806 = vmul.f32 %v490, 0.5
    %v807 = vmul.f32 %v703, 0.5
    %v808 = vmul.f32 %v705, 0.5
    %v809 = vmul.f32 %v494, 0.5
    %v810 = vmul.f32 %v496, 0.5
    %v811 = vmul.f32 %v709, 0.5
    %v812 = vmul.f32 %v711, 0.5
    %v813 = vtanh.pop %v713
    %v814 = vtanh.pop %v714
    %v815 = vtanh.pop %v715
    %v816 = vtanh.pop %v716
    %v817 = vtanh.pop %v717
    %v818 = vtanh.pop %v718
    %v819 = vtanh.pop %v719
    %v820 = vtanh.pop %v720
    %v821 = vtanh.pop %v721
    %v822 = vtanh.pop %v722
    %v823 = vtanh.pop %v723
    %v824 = vtanh.pop %v724
    %v825 = vtanh.pop %v725
    %v826 = vtanh.pop %v726
    %v827 = vtanh.pop %v727
    %v828 = vtanh.pop %v728
    %v829 = vtanh.pop %v729
    %v830 = vtanh.pop %v730
    %v831 = vtanh.pop %v731
    %v832 = vtanh.pop %v732
    %v833 = vtanh.pop %v733
    %v834 = vtanh.pop %v734
    %v835 = vtanh.pop %v735
    %v836 = vtanh.pop %v736
    %v837 = vtanh.pop %v737
    %v838 = vtanh.pop %v738
    %v839 = vtanh.pop %v739
    %v840 = vtanh.pop %v740
    %v841 = vtanh.pop %v741
    %v842 = vtanh.pop %v742
    %v843 = vtanh.pop %v743
    %v844 = vtanh.pop %v744
    %v845 = vtanh.pop %v745
    %v846 = vtanh.pop %v746
    %v847 = vtanh.pop %v747
    %v848 = vtanh.pop %v748
    %v849 = vtanh.pop %v749
    %v850 = vtanh.pop %v750
    %v851 = vtanh.pop %v751
    %v852 = vtanh.pop %v752
    %v853 = vtanh.pop %v753
    %v854 = vtanh.pop %v754
    %v855 = vtanh.pop %v755
    %v856 = vtanh.pop %v756
    %v857 = vtanh.pop %v757
    %v858 = vtanh.pop %v758
    %v859 = vtanh.pop %v759
    %v860 = vtanh.pop %v760
    %v861 = vtanh.pop %v761
    %v862 = vtanh.pop %v762
    %v863 = vtanh.pop %v763
    %v864 = vtanh.pop %v764
    %v865 = vtanh.pop %v765
    %v866 = vtanh.pop %v766
    %v867 = vtanh.pop %v767
    %v868 = vtanh.pop %v768
    %v869 = vtanh.pop %v769
    %v870 = vtanh.pop %v770
    %v871 = vtanh.pop %v771
    %v872 = vtanh.pop %v772
    %v873 = vtanh.pop %v773
    %v874 = vtanh.pop %v774
    %v875 = vtanh.pop %v775
    %v876 = vtanh.pop %v776
    %v877 = vtanh.pop %v777
    %v878 = vtanh.pop %v778
    %v879 = vtanh.pop %v779
    %v880 = vtanh.pop %v780
    %v881 = vtanh.pop %v781
    %v882 = vtanh.pop %v782
    %v883 = vtanh.pop %v783
    %v884 = vtanh.pop %v784
    %v885 = vtanh.pop %v785
    %v886 = vtanh.pop %v786
    %v887 = vtanh.pop %v787
    %v888 = vtanh.pop %v788
    %v889 = vtanh.pop %v789
    %v890 = vtanh.pop %v790
    %v891 = vtanh.pop %v791
    %v892 = vtanh.pop %v792
    %v893 = vtanh.pop %v793
    %v894 = vtanh.pop %v794
    %v895 = vtanh.pop %v795
    %v896 = vtanh.pop %v796
    %v897 = vtanh.pop %v797
    %v898 = vtanh.pop %v798
    %v899 = vtanh.pop %v799
    %v900 = vtanh.pop %v800
    %v901 = vtanh.pop %v801
    %v902 = vtanh.pop %v802
    %v903 = vtanh.pop %v803
    %v904 = vtanh.pop %v804
    %v905 = vtanh.pop %v805
    %v906 = vtanh.pop %v806
    %v907 = vtanh.pop %v807
    %v908 = vtanh.pop %v808
    %v909 = vtanh.pop %v809
    %v910 = vtanh.pop %v810
    %v911 = vtanh.pop %v811
    %v912 = vtanh.pop %v812
    %v913 = vmul.f32 %v813, 0.5
    %v914 = vmul.f32 %v814, 0.5
    %v915 = vmul.f32 %v815, 0.5
    %v916 = vmul.f32 %v816, 0.5
    %v917 = vmul.f32 %v817, 0.5
    %v918 = vmul.f32 %v818, 0.5
    %v919 = vmul.f32 %v819, 0.5
    %v920 = vmul.f32 %v820, 0.5
    %v921 = vmul.f32 %v821, 0.5
    %v922 = vmul.f32 %v822, 0.5
    %v923 = vmul.f32 %v823, 0.5
    %v924 = vmul.f32 %v824, 0.5
    %v925 = vmul.f32 %v825, 0.5
    %v926 = vmul.f32 %v826, 0.5
    %v927 = vmul.f32 %v827, 0.5
    %v928 = vmul.f32 %v828, 0.5
    %v929 = vmul.f32 %v829, 0.5
    %v930 = vmul.f32 %v830, 0.5
    %v931 = vmul.f32 %v831, 0.5
    %v932 = vmul.f32 %v832, 0.5
    %v933 = vmul.f32 %v833, 0.5
    %v934 = vmul.f32 %v834, 0.5
    %v935 = vmul.f32 %v835, 0.5
    %v936 = vmul.f32 %v836, 0.5
    %v937 = vmul.f32 %v837, 0.5
    %v938 = vmul.f32 %v838, 0.5
    %v939 = vmul.f32 %v839, 0.5
    %v940 = vmul.f32 %v840, 0.5
    %v941 = vmul.f32 %v841, 0.5
    %v942 = vmul.f32 %v842, 0.5
    %v943 = vmul.f32 %v843, 0.5
    %v944 = vmul.f32 %v844, 0.5
    %v945 = vmul.f32 %v845, 0.5
    %v946 = vmul.f32 %v846, 0.5
    %v947 = vmul.f32 %v847, 0.5
    %v948 = vmul.f32 %v848, 0.5
    %v949 = vmul.f32 %v849, 0.5
    %v950 = vmul.f32 %v850, 0.5
    %v951 = vmul.f32 %v851, 0.5
    %v952 = vmul.f32 %v852, 0.5
    %v953 = vmul.f32 %v853, 0.5
    %v954 = vmul.f32 %v854, 0.5
    %v955 = vmul.f32 %v855, 0.5
    %v956 = vmul.f32 %v856, 0.5
    %v957 = vmul.f32 %v857, 0.5
    %v958 = vmul.f32 %v858, 0.5
    %v959 = vmul.f32 %v859, 0.5
    %v960 = vmul.f32 %v860, 0.5
    %v961 = vmul.f32 %v861, 0.5
    %v962 = vmul.f32 %v862, 0.5
    %v963 = vmul.f32 %v863, 0.5
    %v964 = vmul.f32 %v864, 0.5
    %v965 = vmul.f32 %v865, 0.5
    %v966 = vmul.f32 %v866, 0.5
    %v967 = vmul.f32 %v867, 0.5
    %v968 = vmul.f32 %v868, 0.5
    %v969 = vmul.f32 %v869, 0.5
    %v970 = vmul.f32 %v870, 0.5
    %v971 = vmul.f32 %v871, 0.5
    %v972 = vmul.f32 %v872, 0.5
    %v973 = vmul.f32 %v873, 0.5
    %v974 = vmul.f32 %v874, 0.5
    %v975 = vmul.f32 %v875, 0.5
    %v976 = vmul.f32 %v876, 0.5
    %v977 = vmul.f32 %v877, 0.5
    %v978 = vmul.f32 %v878, 0.5
    %v979 = vmul.f32 %v879, 0.5
    %v980 = vmul.f32 %v880, 0.5
    %v981 = vmul.f32 %v881, 0.5
    %v982 = vmul.f32 %v882, 0.5
    %v983 = vmul.f32 %v883, 0.5
    %v984 = vmul.f32 %v884, 0.5
    %v985 = vmul.f32 %v885, 0.5
    %v986 = vmul.f32 %v886, 0.5
    %v987 = vmul.f32 %v887, 0.5
    %v988 = vmul.f32 %v888, 0.5
    %v989 = vmul.f32 %v889, 0.5
    %v990 = vmul.f32 %v890, 0.5
    %v991 = vmul.f32 %v891, 0.5
    %v992 = vmul.f32 %v892, 0.5
    %v993 = vmul.f32 %v893, 0.5
    %v994 = vmul.f32 %v894, 0.5
    %v995 = vmul.f32 %v895, 0.5
    %v996 = vmul.f32 %v896, 0.5
    %v997 = vmul.f32 %v897, 0.5
    %v998 = vmul.f32 %v898, 0.5
    %v999 = vmul.f32 %v899, 0.5
    %v1000 = vmul.f32 %v900, 0.5
    %v1001 = vmul.f32 %v901, 0.5
    %v1002 = vmul.f32 %v902, 0.5
    %v1003 = vmul.f32 %v903, 0.5
    %v1004 = vmul.f32 %v904, 0.5
    %v1005 = vmul.f32 %v905, 0.5
    %v1006 = vmul.f32 %v906, 0.5
    %v1007 = vmul.f32 %v907, 0.5
    %v1008 = vmul.f32 %v908, 0.5
    %v1009 = vmul.f32 %v909, 0.5
    %v1010 = vmul.f32 %v910, 0.5
    %v1011 = vmul.f32 %v911, 0.5
    %v1012 = vmul.f32 %v912, 0.5
    %v1013 = vadd.f32 %v913, 0.5
    %v1014 = vadd.f32 %v914, 0.5
    %v1015 = vadd.f32 %v915, 0.5
    %v1016 = vadd.f32 %v916, 0.5
    %v1017 = vadd.f32 %v917, 0.5
    %v1018 = vadd.f32 %v918, 0.5
    %v1019 = vadd.f32 %v919, 0.5
    %v1020 = vadd.f32 %v920, 0.5
    %v1021 = vadd.f32 %v921, 0.5
    %v1022 = vadd.f32 %v922, 0.5
    %v1023 = vadd.f32 %v923, 0.5
    %v1024 = vadd.f32 %v924, 0.5
    %v1025 = vadd.f32 %v925, 0.5
    %v1026 = vadd.f32 %v926, 0.5
    %v1027 = vadd.f32 %v927, 0.5
    %v1028 = vadd.f32 %v928, 0.5
    %v1029 = vadd.f32 %v929, 0.5
    %v1030 = vadd.f32 %v930, 0.5
    %v1031 = vadd.f32 %v931, 0.5
    %v1032 = vadd.f32 %v932, 0.5
    %v1033 = vadd.f32 %v933, 0.5
    %v1034 = vadd.f32 %v934, 0.5
    %v1035 = vadd.f32 %v935, 0.5
    %v1036 = vadd.f32 %v936, 0.5
    %v1037 = vadd.f32 %v937, 0.5
    %v1038 = vadd.f32 %v938, 0.5
    %v1039 = vadd.f32 %v939, 0.5
    %v1040 = vadd.f32 %v940, 0.5
    %v1041 = vadd.f32 %v941, 0.5
    %v1042 = vadd.f32 %v942, 0.5
    %v1043 = vadd.f32 %v943, 0.5
    %v1044 = vadd.f32 %v944, 0.5
    %v1045 = vadd.f32 %v945, 0.5
    %v1046 = vadd.f32 %v946, 0.5
    %v1047 = vadd.f32 %v947, 0.5
    %v1048 = vadd.f32 %v948, 0.5
    %v1049 = vadd.f32 %v949, 0.5
    %v1050 = vadd.f32 %v950, 0.5
    %v1051 = vadd.f32 %v951, 0.5
    %v1052 = vadd.f32 %v952, 0.5
    %v1053 = vadd.f32 %v953, 0.5
    %v1054 = vadd.f32 %v954, 0.5
    %v1055 = vadd.f32 %v955, 0.5
    %v1056 = vadd.f32 %v956, 0.5
    %v1057 = vadd.f32 %v957, 0.5
    %v1058 = vadd.f32 %v958, 0.5
    %v1059 = vadd.f32 %v959, 0.5
    %v1060 = vadd.f32 %v960, 0.5
    %v1061 = vadd.f32 %v961, 0.5
    %v1062 = vadd.f32 %v962, 0.5
    %v1063 = vadd.f32 %v963, 0.5
    %v1064 = vadd.f32 %v964, 0.5
    %v1065 = vadd.f32 %v965, 0.5
    %v1066 = vadd.f32 %v966, 0.5
    %v1067 = vadd.f32 %v967, 0.5
    %v1068 = vadd.f32 %v968, 0.5
    %v1069 = vadd.f32 %v969, 0.5
    %v1070 = vadd.f32 %v970, 0.5
    %v1071 = vadd.f32 %v971, 0.5
    %v1072 = vadd.f32 %v972, 0.5
    %v1073 = vadd.f32 %v973, 0.5
    %v1074 = vadd.f32 %v974, 0.5
    %v1075 = vadd.f32 %v975, 0.5
    %v1076 = vadd.f32 %v976, 0.5
    %v1077 = vadd.f32 %v977, 0.5
    %v1078 = vadd.f32 %v978, 0.5
    %v1079 = vadd.f32 %v979, 0.5
    %v1080 = vadd.f32 %v980, 0.5
    %v1081 = vadd.f32 %v981, 0.5
    %v1082 = vadd.f32 %v982, 0.5
    %v1083 = vadd.f32 %v983, 0.5
    %v1084 = vadd.f32 %v984, 0.5
    %v1085 = vadd.f32 %v985, 0.5
    %v1086 = vadd.f32 %v986, 0.5
    %v1087 = vadd.f32 %v987, 0.5
    %v1088 = vadd.f32 %v988, 0.5
    %v1089 = vadd.f32 %v989, 0.5
    %v1090 = vadd.f32 %v990, 0.5
    %v1091 = vadd.f32 %v991, 0.5
    %v1092 = vadd.f32 %v992, 0.5
    %v1093 = vadd.f32 %v993, 0.5
    %v1094 = vadd.f32 %v994, 0.5
    %v1095 = vadd.f32 %v995, 0.5
    %v1096 = vadd.f32 %v996, 0.5
    %v1097 = vadd.f32 %v997, 0.5
    %v1098 = vadd.f32 %v998, 0.5
    %v1099 = vadd.f32 %v999, 0.5
    %v1100 = vadd.f32 %v1000, 0.5
    %v1101 = vadd.f32 %v1001, 0.5
    %v1102 = vadd.f32 %v1002, 0.5
    %v1103 = vadd.f32 %v1003, 0.5
    %v1104 = vadd.f32 %v1004, 0.5
    %v1105 = vadd.f32 %v1005, 0.5
    %v1106 = vadd.f32 %v1006, 0.5
    %v1107 = vadd.f32 %v1007, 0.5
    %v1108 = vadd.f32 %v1008, 0.5
    %v1109 = vadd.f32 %v1009, 0.5
    %v1110 = vadd.f32 %v1010, 0.5
    %v1111 = vadd.f32 %v1011, 0.5
    %v1112 = vadd.f32 %v1012, 0.5
    %v1113 = vld [vmem:[%s3] sm:$0xff]
    %v1114 = vld [vmem:[%s3 + $0x8] sm:$0xff]
    %v1115 = vld [vmem:[%s3 + $0x10] sm:$0xff]
    %v1116 = vld [vmem:[%s3 + $0x18] sm:$0xff]
    %v1117 = vld [vmem:[%s3 + $0x20] sm:$0xff]
    %v1118 = vld [vmem:[%s3 + $0x28] sm:$0xff]
    %v1119 = vld [vmem:[%s3 + $0x30] sm:$0x11]
    %v1120 = vpack.c.bf16 %v1017, %v1013
    %v1121 = vpack.c.bf16 %v1018, %v1014
    %v1122 = vpack.c.bf16 %v1019, %v1015
    %v1123 = vpack.c.bf16 %v1020, %v1016
    %v1124 = vpack.c.bf16 %v1025, %v1021
    %v1125 = vpack.c.bf16 %v1026, %v1022
    %v1126 = vpack.c.bf16 %v1027, %v1023
    %v1127 = vpack.c.bf16 %v1028, %v1024
    %v1128 = vpack.c.bf16 %v1033, %v1029
    %v1129 = vpack.c.bf16 %v1034, %v1030
    %v1130 = vpack.c.bf16 %v1035, %v1031
    %v1131 = vpack.c.bf16 %v1036, %v1032
    %v1132 = vpack.c.bf16 %v1041, %v1037
    %v1133 = vpack.c.bf16 %v1042, %v1038
    %v1134 = vpack.c.bf16 %v1043, %v1039
    %v1135 = vpack.c.bf16 %v1044, %v1040
    %v1136 = vpack.c.bf16 %v1049, %v1045
    %v1137 = vpack.c.bf16 %v1050, %v1046
    %v1138 = vpack.c.bf16 %v1051, %v1047
    %v1139 = vpack.c.bf16 %v1052, %v1048
    %v1140 = vpack.c.bf16 %v1057, %v1053
    %v1141 = vpack.c.bf16 %v1058, %v1054
    %v1142 = vpack.c.bf16 %v1059, %v1055
    %v1143 = vpack.c.bf16 %v1060, %v1056
    %v1144 = vpack.c.bf16 %v1065, %v1061
    %v1145 = vpack.c.bf16 %v1066, %v1062
    %v1146 = vpack.c.bf16 %v1067, %v1063
    %v1147 = vpack.c.bf16 %v1068, %v1064
    %v1148 = vpack.c.bf16 %v1073, %v1069
    %v1149 = vpack.c.bf16 %v1074, %v1070
    %v1150 = vpack.c.bf16 %v1075, %v1071
    %v1151 = vpack.c.bf16 %v1076, %v1072
    %v1152 = vpack.c.bf16 %v1081, %v1077
    %v1153 = vpack.c.bf16 %v1082, %v1078
    %v1154 = vpack.c.bf16 %v1083, %v1079
    %v1155 = vpack.c.bf16 %v1084, %v1080
    %v1156 = vpack.c.bf16 %v1089, %v1085
    %v1157 = vpack.c.bf16 %v1090, %v1086
    %v1158 = vpack.c.bf16 %v1091, %v1087
    %v1159 = vpack.c.bf16 %v1092, %v1088
    %v1160 = vpack.c.bf16 %v1097, %v1093
    %v1161 = vpack.c.bf16 %v1098, %v1094
    %v1162 = vpack.c.bf16 %v1099, %v1095
    %v1163 = vpack.c.bf16 %v1100, %v1096
    %v1164 = vpack.c.bf16 %v1105, %v1101
    %v1165 = vpack.c.bf16 %v1106, %v1102
    %v1166 = vpack.c.bf16 %v1107, %v1103
    %v1167 = vpack.c.bf16 %v1108, %v1104
    %v1168 = vpack.c.bf16 %v1109, %v1109
    %v1169 = vpack.c.bf16 %v1110, %v1110
    %v1170 = vpack.c.bf16 %v1111, %v1111
    %v1171 = vpack.c.bf16 %v1112, %v1112
    %v1172 = vld [vmem:[%s4] sm:$0xff]
    %v1173 = vld [vmem:[%s4 + $0x8] sm:$0xff]
    %v1174 = vld [vmem:[%s4 + $0x10] sm:$0xff]
    %v1175 = vld [vmem:[%s4 + $0x18] sm:$0xff]
    %v1176 = vld [vmem:[%s4 + $0x20] sm:$0xff]
    %v1177 = vld [vmem:[%s4 + $0x28] sm:$0xff]
    %v1178 = vld [vmem:[%s4 + $0x30] sm:$0x3]
    %1180 = vset.pattern.permute.xlu0 0
    %1181 = vperm.xlu0 %1180, %v1172
    %v1182 = vpop.permute.xlu0 %1181
    %1185 = vset.pattern.permute.xlu0 0
    %1186 = vperm.xlu0 %1185, %v1173
    %v1187 = vpop.permute.xlu0 %1186
    %1190 = vset.pattern.permute.xlu0 0
    %1191 = vperm.xlu0 %1190, %v1174
    %v1192 = vpop.permute.xlu0 %1191
    %1195 = vset.pattern.permute.xlu0 0
    %1196 = vperm.xlu0 %1195, %v1175
    %v1197 = vpop.permute.xlu0 %1196
    %1200 = vset.pattern.permute.xlu0 0
    %1201 = vperm.xlu0 %1200, %v1176
    %v1202 = vpop.permute.xlu0 %1201
    %1205 = vset.pattern.permute.xlu0 0
    %1206 = vperm.xlu0 %1205, %v1177
    %v1207 = vpop.permute.xlu0 %1206
    %1210 = vset.pattern.permute.xlu0 0
    %1211 = vperm.xlu0 %1210, %v1178
    %v1212 = vpop.permute.xlu0 %1211
    %v1221 = vunpack.c.l.b16 %v1113
    %v1222 = vunpack.c.h.b16 %v1113
    %v1223 = vunpack.c.l.b16 %v1114
    %v1224 = vunpack.c.h.b16 %v1114
    %v1225 = vunpack.c.l.b16 %v1115
    %v1226 = vunpack.c.h.b16 %v1115
    %v1227 = vunpack.c.l.b16 %v1116
    %v1228 = vunpack.c.h.b16 %v1116
    %v1229 = vunpack.c.l.b16 %v1117
    %v1230 = vunpack.c.h.b16 %v1117
    %v1231 = vunpack.c.l.b16 %v1118
    %v1232 = vunpack.c.h.b16 %v1118
    %v1233 = vunpack.c.l.b16 %v1119
    %v1234 = vunpack.c.h.b16 %v1119
    %v1235 = vpack.c.b16 %v1223, %v1221
    %v1236 = vpack.c.b16 %v1224, %v1222
    %v1237 = vpack.c.b16 %v1227, %v1225
    %v1238 = vpack.c.b16 %v1228, %v1226
    %v1239 = vpack.c.b16 %v1231, %v1229
    %v1240 = vpack.c.b16 %v1232, %v1230
    %v1241 = vpack.c.b16 %v1233, %v1233
    %v1242 = vpack.c.b16 %v1234, %v1234
    %vm1247 = vcmask 588800
    %v1249 = vsel %vm1247, %v1236, 0
    %v1252 = vsel %vm1247, %v1238, 0
    %v1255 = vsel %vm1247, %v1240, 0
    %v1258 = vsel %vm1247, %v1242, 0
    %vm1260 = vcmask 1043456
    %v1262 = vsel %vm1260, %v1168, 0
    %v1265 = vsel %vm1260, %v1169, 0
    %v1268 = vsel %vm1260, %v1170, 0
    %v1271 = vsel %vm1260, %v1171, 0
    %1273 = vmatprep.subr.bf16.mxu0 %v1121
    %1274 = vmatpush1.bf16.msra.mxu0 %v1120
    %1275 = vmatprep.subr.bf16.mxu0 %v1125
    %1276 = vmatpush1.bf16.msra.mxu0 %v1124
    %1277 = vmatprep.subr.bf16.mxu0 %v1129
    %1278 = vmatpush1.bf16.msra.mxu0 %v1128
    %1279 = vmatprep.subr.bf16.mxu0 %v1133
    %1280 = vmatpush1.bf16.msra.mxu0 %v1132
    %1281 = vmatprep.subr.bf16.mxu0 %v1137
    %1282 = vmatpush1.bf16.msra.mxu0 %v1136
    %1283 = vmatprep.subr.bf16.mxu0 %v1141
    %1284 = vmatpush1.bf16.msra.mxu0 %v1140
    %1285 = vmatprep.subr.bf16.mxu0 %v1145
    %1286 = vmatpush1.bf16.msra.mxu0 %v1144
    %1287 = vmatprep.subr.bf16.mxu0 %v1149
    %1288 = vmatpush1.bf16.msra.mxu0 %v1148
    %1289 = vmatprep.subr.bf16.mxu0 %v1153
    %1290 = vmatpush1.bf16.msra.mxu0 %v1152
    %1291 = vmatprep.subr.bf16.mxu0 %v1157
    %1292 = vmatpush1.bf16.msra.mxu0 %v1156
    %1293 = vmatprep.subr.bf16.mxu0 %v1161
    %1294 = vmatpush1.bf16.msra.mxu0 %v1160
    %1295 = vmatprep.subr.bf16.mxu0 %v1165
    %1296 = vmatpush1.bf16.msra.mxu0 %v1164
    %1297 = vmatprep.subr.bf16.mxu0 %v1265
    %1298 = vmatpush1.bf16.msra.mxu0 %v1262
    %1299 = vmatprep.subr.bf16.mxu0 0
    %1300 = vmatpush1.bf16.msra.mxu0 0
    %1301 = vmatprep.subr.bf16.mxu0 0
    %1302 = vmatpush1.bf16.msra.mxu0 0
    %1303 = vmatprep.subr.bf16.mxu0 0
    %1304 = vmatpush1.bf16.msra.mxu0 0
    %1305 = vmatprep.mubr.bf16.mxu0 %v1249
    %1306 = vmatmul.mubr.bf16.gmra.mrb[0].mxu0 %v1235
    %v1307 = vpop.f32.mrb[0].mxu0
    %v1308 = vadd.f32 %v1182, %v1307
    %v1309 = vpop.f32.mrb[0].mxu0
    %v1310 = vadd.f32 %v1182, %v1309
    %v1311 = vpop.f32.mrb[0].mxu0
    %v1312 = vadd.f32 %v1187, %v1311
    %v1313 = vpop.f32.mrb[0].mxu0
    %v1314 = vadd.f32 %v1187, %v1313
    %1315 = vmatprep.mubr.bf16.mxu0 %v1252
    %1316 = vmatmul.mubr.bf16.gmra.mrb[0].mxu0 %v1237
    %v1317 = vpop.f32.mrb[0].mxu0
    %v1318 = vadd.f32 %v1192, %v1317
    %v1319 = vpop.f32.mrb[0].mxu0
    %v1320 = vadd.f32 %v1192, %v1319
    %v1321 = vpop.f32.mrb[0].mxu0
    %v1322 = vadd.f32 %v1197, %v1321
    %v1323 = vpop.f32.mrb[0].mxu0
    %v1324 = vadd.f32 %v1197, %v1323
    %1325 = vmatprep.mubr.bf16.mxu0 %v1255
    %1326 = vmatmul.mubr.bf16.gmra.mrb[0].mxu0 %v1239
    %v1327 = vpop.f32.mrb[0].mxu0
    %v1328 = vadd.f32 %v1202, %v1327
    %v1329 = vpop.f32.mrb[0].mxu0
    %v1330 = vadd.f32 %v1202, %v1329
    %v1331 = vpop.f32.mrb[0].mxu0
    %v1332 = vadd.f32 %v1207, %v1331
    %v1333 = vpop.f32.mrb[0].mxu0
    %v1334 = vadd.f32 %v1207, %v1333
    %1335 = vmatprep.mubr.bf16.mxu0 %v1258
    %1336 = vmatmul.mubr.bf16.gmra.mrb[0].mxu0 %v1241
    %v1337 = vpop.f32.mrb[0].mxu0
    %v1338 = vadd.f32 %v1212, %v1337
    %v1339 = vpop.f32.mrb[0].mxu0
    %v1340 = vadd.f32 %v1212, %v1339
    %v1341 = vpop.f32.mrb[0].mxu0
    %v1342 = vpop.f32.mrb[0].mxu0
    %1343 = vdwg.mxu0
    %1344 = vmatprep.subr.bf16.mxu0 %v1123
    %1345 = vmatpush1.bf16.msra.mxu0 %v1122
    %1346 = vmatprep.subr.bf16.mxu0 %v1127
    %1347 = vmatpush1.bf16.msra.mxu0 %v1126
    %1348 = vmatprep.subr.bf16.mxu0 %v1131
    %1349 = vmatpush1.bf16.msra.mxu0 %v1130
    %1350 = vmatprep.subr.bf16.mxu0 %v1135
    %1351 = vmatpush1.bf16.msra.mxu0 %v1134
    %1352 = vmatprep.subr.bf16.mxu0 %v1139
    %1353 = vmatpush1.bf16.msra.mxu0 %v1138
    %1354 = vmatprep.subr.bf16.mxu0 %v1143
    %1355 = vmatpush1.bf16.msra.mxu0 %v1142
    %1356 = vmatprep.subr.bf16.mxu0 %v1147
    %1357 = vmatpush1.bf16.msra.mxu0 %v1146
    %1358 = vmatprep.subr.bf16.mxu0 %v1151
    %1359 = vmatpush1.bf16.msra.mxu0 %v1150
    %1360 = vmatprep.subr.bf16.mxu0 %v1155
    %1361 = vmatpush1.bf16.msra.mxu0 %v1154
    %1362 = vmatprep.subr.bf16.mxu0 %v1159
    %1363 = vmatpush1.bf16.msra.mxu0 %v1158
    %1364 = vmatprep.subr.bf16.mxu0 %v1163
    %1365 = vmatpush1.bf16.msra.mxu0 %v1162
    %1366 = vmatprep.subr.bf16.mxu0 %v1167
    %1367 = vmatpush1.bf16.msra.mxu0 %v1166
    %1368 = vmatprep.subr.bf16.mxu0 %v1271
    %1369 = vmatpush1.bf16.msra.mxu0 %v1268
    %1370 = vmatprep.subr.bf16.mxu0 0
    %1371 = vmatpush1.bf16.msra.mxu0 0
    %1372 = vmatprep.subr.bf16.mxu0 0
    %1373 = vmatpush1.bf16.msra.mxu0 0
    %1374 = vmatprep.subr.bf16.mxu0 0
    %1375 = vmatpush1.bf16.msra.mxu0 0
    %1376 = vmatprep.mubr.bf16.mxu0 %v1249
    %1377 = vmatmul.mubr.bf16.gmra.mrb[0].mxu0 %v1235
    %v1378 = vpop.f32.mrb[0].mxu0
    %v1379 = vadd.f32 %v1182, %v1378
    %v1380 = vpop.f32.mrb[0].mxu0
    %v1381 = vadd.f32 %v1182, %v1380
    %v1382 = vpop.f32.mrb[0].mxu0
    %v1383 = vadd.f32 %v1187, %v1382
    %v1384 = vpop.f32.mrb[0].mxu0
    %v1385 = vadd.f32 %v1187, %v1384
    %1386 = vmatprep.mubr.bf16.mxu0 %v1252
    %1387 = vmatmul.mubr.bf16.gmra.mrb[0].mxu0 %v1237
    %v1388 = vpop.f32.mrb[0].mxu0
    %v1389 = vadd.f32 %v1192, %v1388
    %v1390 = vpop.f32.mrb[0].mxu0
    %v1391 = vadd.f32 %v1192, %v1390
    %v1392 = vpop.f32.mrb[0].mxu0
    %v1393 = vadd.f32 %v1197, %v1392
    %v1394 = vpop.f32.mrb[0].mxu0
    %v1395 = vadd.f32 %v1197, %v1394
    %1396 = vmatprep.mubr.bf16.mxu0 %v1255
    %1397 = vmatmul.mubr.bf16.gmra.mrb[0].mxu0 %v1239
    %v1398 = vpop.f32.mrb[0].mxu0
    %v1399 = vadd.f32 %v1202, %v1398
    %v1400 = vpop.f32.mrb[0].mxu0
    %v1401 = vadd.f32 %v1202, %v1400
    %v1402 = vpop.f32.mrb[0].mxu0
    %v1403 = vadd.f32 %v1207, %v1402
    %v1404 = vpop.f32.mrb[0].mxu0
    %v1405 = vadd.f32 %v1207, %v1404
    %1406 = vmatprep.mubr.bf16.mxu0 %v1258
    %1407 = vmatmul.mubr.bf16.gmra.mrb[0].mxu0 %v1241
    %v1408 = vpop.f32.mrb[0].mxu0
    %v1409 = vadd.f32 %v1212, %v1408
    %v1410 = vpop.f32.mrb[0].mxu0
    %v1411 = vadd.f32 %v1212, %v1410
    %v1412 = vpop.f32.mrb[0].mxu0
    %v1413 = vpop.f32.mrb[0].mxu0
    %1414 = vdwg.mxu0
    %v1415 = vmul.f32 %v1308, 0.5
    %v1416 = vmul.f32 %v1310, 0.5
    %v1417 = vmul.f32 %v1379, 0.5
    %v1418 = vmul.f32 %v1381, 0.5
    %v1419 = vmul.f32 %v1312, 0.5
    %v1420 = vmul.f32 %v1314, 0.5
    %v1421 = vmul.f32 %v1383, 0.5
    %v1422 = vmul.f32 %v1385, 0.5
    %v1423 = vmul.f32 %v1318, 0.5
    %v1424 = vmul.f32 %v1320, 0.5
    %v1425 = vmul.f32 %v1389, 0.5
    %v1426 = vmul.f32 %v1391, 0.5
    %v1427 = vmul.f32 %v1322, 0.5
    %v1428 = vmul.f32 %v1324, 0.5
    %v1429 = vmul.f32 %v1393, 0.5
    %v1430 = vmul.f32 %v1395, 0.5
    %v1431 = vmul.f32 %v1328, 0.5
    %v1432 = vmul.f32 %v1330, 0.5
    %v1433 = vmul.f32 %v1399, 0.5
    %v1434 = vmul.f32 %v1401, 0.5
    %v1435 = vmul.f32 %v1332, 0.5
    %v1436 = vmul.f32 %v1334, 0.5
    %v1437 = vmul.f32 %v1403, 0.5
    %v1438 = vmul.f32 %v1405, 0.5
    %v1439 = vmul.f32 %v1338, 0.5
    %v1440 = vmul.f32 %v1340, 0.5
    %v1441 = vmul.f32 %v1409, 0.5
    %v1442 = vmul.f32 %v1411, 0.5
    %v1443 = vtanh.pop %v1415
    %v1444 = vtanh.pop %v1416
    %v1445 = vtanh.pop %v1417
    %v1446 = vtanh.pop %v1418
    %v1447 = vtanh.pop %v1419
    %v1448 = vtanh.pop %v1420
    %v1449 = vtanh.pop %v1421
    %v1450 = vtanh.pop %v1422
    %v1451 = vtanh.pop %v1423
    %v1452 = vtanh.pop %v1424
    %v1453 = vtanh.pop %v1425
    %v1454 = vtanh.pop %v1426
    %v1455 = vtanh.pop %v1427
    %v1456 = vtanh.pop %v1428
    %v1457 = vtanh.pop %v1429
    %v1458 = vtanh.pop %v1430
    %v1459 = vtanh.pop %v1431
    %v1460 = vtanh.pop %v1432
    %v1461 = vtanh.pop %v1433
    %v1462 = vtanh.pop %v1434
    %v1463 = vtanh.pop %v1435
    %v1464 = vtanh.pop %v1436
    %v1465 = vtanh.pop %v1437
    %v1466 = vtanh.pop %v1438
    %v1467 = vtanh.pop %v1439
    %v1468 = vtanh.pop %v1440
    %v1469 = vtanh.pop %v1441
    %v1470 = vtanh.pop %v1442
    %v1471 = vmul.f32 %v1443, 0.5
    %v1472 = vmul.f32 %v1444, 0.5
    %v1473 = vmul.f32 %v1445, 0.5
    %v1474 = vmul.f32 %v1446, 0.5
    %v1475 = vmul.f32 %v1447, 0.5
    %v1476 = vmul.f32 %v1448, 0.5
    %v1477 = vmul.f32 %v1449, 0.5
    %v1478 = vmul.f32 %v1450, 0.5
    %v1479 = vmul.f32 %v1451, 0.5
    %v1480 = vmul.f32 %v1452, 0.5
    %v1481 = vmul.f32 %v1453, 0.5
    %v1482 = vmul.f32 %v1454, 0.5
    %v1483 = vmul.f32 %v1455, 0.5
    %v1484 = vmul.f32 %v1456, 0.5
    %v1485 = vmul.f32 %v1457, 0.5
    %v1486 = vmul.f32 %v1458, 0.5
    %v1487 = vmul.f32 %v1459, 0.5
    %v1488 = vmul.f32 %v1460, 0.5
    %v1489 = vmul.f32 %v1461, 0.5
    %v1490 = vmul.f32 %v1462, 0.5
    %v1491 = vmul.f32 %v1463, 0.5
    %v1492 = vmul.f32 %v1464, 0.5
    %v1493 = vmul.f32 %v1465, 0.5
    %v1494 = vmul.f32 %v1466, 0.5
    %v1495 = vmul.f32 %v1467, 0.5
    %v1496 = vmul.f32 %v1468, 0.5
    %v1497 = vmul.f32 %v1469, 0.5
    %v1498 = vmul.f32 %v1470, 0.5
    %v1499 = vadd.f32 %v1471, 0.5
    %v1500 = vadd.f32 %v1472, 0.5
    %v1501 = vadd.f32 %v1473, 0.5
    %v1502 = vadd.f32 %v1474, 0.5
    %v1503 = vadd.f32 %v1475, 0.5
    %v1504 = vadd.f32 %v1476, 0.5
    %v1505 = vadd.f32 %v1477, 0.5
    %v1506 = vadd.f32 %v1478, 0.5
    %v1507 = vadd.f32 %v1479, 0.5
    %v1508 = vadd.f32 %v1480, 0.5
    %v1509 = vadd.f32 %v1481, 0.5
    %v1510 = vadd.f32 %v1482, 0.5
    %v1511 = vadd.f32 %v1483, 0.5
    %v1512 = vadd.f32 %v1484, 0.5
    %v1513 = vadd.f32 %v1485, 0.5
    %v1514 = vadd.f32 %v1486, 0.5
    %v1515 = vadd.f32 %v1487, 0.5
    %v1516 = vadd.f32 %v1488, 0.5
    %v1517 = vadd.f32 %v1489, 0.5
    %v1518 = vadd.f32 %v1490, 0.5
    %v1519 = vadd.f32 %v1491, 0.5
    %v1520 = vadd.f32 %v1492, 0.5
    %v1521 = vadd.f32 %v1493, 0.5
    %v1522 = vadd.f32 %v1494, 0.5
    %v1523 = vadd.f32 %v1495, 0.5
    %v1524 = vadd.f32 %v1496, 0.5
    %v1525 = vadd.f32 %v1497, 0.5
    %v1526 = vadd.f32 %v1498, 0.5
    %v1527 = vld [vmem:[%s5] sm:$0x3]
    %v1528 = vpack.c.bf16 %v1503, %v1499
    %v1529 = vpack.c.bf16 %v1504, %v1500
    %v1530 = vpack.c.bf16 %v1505, %v1501
    %v1531 = vpack.c.bf16 %v1506, %v1502
    %v1532 = vpack.c.bf16 %v1511, %v1507
    %v1533 = vpack.c.bf16 %v1512, %v1508
    %v1534 = vpack.c.bf16 %v1513, %v1509
    %v1535 = vpack.c.bf16 %v1514, %v1510
    %v1536 = vpack.c.bf16 %v1519, %v1515
    %v1537 = vpack.c.bf16 %v1520, %v1516
    %v1538 = vpack.c.bf16 %v1521, %v1517
    %v1539 = vpack.c.bf16 %v1522, %v1518
    %v1540 = vpack.c.bf16 %v1523, %v1523
    %v1541 = vpack.c.bf16 %v1524, %v1524
    %v1542 = vpack.c.bf16 %v1525, %v1525
    %v1543 = vpack.c.bf16 %v1526, %v1526
    %v1544 = vld [vmem:[%s6] sm:$0x7]
    %1546 = vset.pattern.permute.xlu0 0
    %1547 = vperm.xlu0 %1546, %v1544
    %v1548 = vpop.permute.xlu0 %1547
    %vm1550 = vcmask 408576
    %v1552 = vsel %vm1550, %v1527, 0
    %vm1554 = vcmask 1040384
    %v1556 = vsel %vm1554, %v1540, 0
    %v1559 = vsel %vm1554, %v1541, 0
    %v1562 = vsel %vm1554, %v1542, 0
    %v1565 = vsel %vm1554, %v1543, 0
    %1567 = vmatprep.subr.bf16.mxu0 %v1529
    %1568 = vmatpush1.bf16.msra.mxu0 %v1528
    %1569 = vmatprep.subr.bf16.mxu0 %v1533
    %1570 = vmatpush1.bf16.msra.mxu0 %v1532
    %1571 = vmatprep.subr.bf16.mxu0 %v1537
    %1572 = vmatpush1.bf16.msra.mxu0 %v1536
    %1573 = vmatprep.subr.bf16.mxu0 %v1559
    %1574 = vmatpush1.bf16.msra.mxu0 %v1556
    %1575 = vmatprep.subr.bf16.mxu0 0
    %1576 = vmatpush1.bf16.msra.mxu0 0
    %1577 = vmatprep.subr.bf16.mxu0 0
    %1578 = vmatpush1.bf16.msra.mxu0 0
    %1579 = vmatprep.subr.bf16.mxu0 0
    %1580 = vmatpush1.bf16.msra.mxu0 0
    %1581 = vmatprep.subr.bf16.mxu0 0
    %1582 = vmatpush1.bf16.msra.mxu0 0
    %1583 = vmatprep.subr.bf16.mxu0 0
    %1584 = vmatpush1.bf16.msra.mxu0 0
    %1585 = vmatprep.subr.bf16.mxu0 0
    %1586 = vmatpush1.bf16.msra.mxu0 0
    %1587 = vmatprep.subr.bf16.mxu0 0
    %1588 = vmatpush1.bf16.msra.mxu0 0
    %1589 = vmatprep.subr.bf16.mxu0 0
    %1590 = vmatpush1.bf16.msra.mxu0 0
    %1591 = vmatprep.subr.bf16.mxu0 0
    %1592 = vmatpush1.bf16.msra.mxu0 0
    %1593 = vmatprep.subr.bf16.mxu0 0
    %1594 = vmatpush1.bf16.msra.mxu0 0
    %1595 = vmatprep.subr.bf16.mxu0 0
    %1596 = vmatpush1.bf16.msra.mxu0 0
    %1597 = vmatprep.subr.bf16.mxu0 0
    %1598 = vmatpush1.bf16.msra.mxu0 0
    %1599 = vmatprep.mubr.bf16.mxu0 0
    %1600 = vmatmul.mubr.bf16.gmra.mrb[0].mxu0 %v1552
    %v1601 = vpop.f32.mrb[0].mxu0
    %v1602 = vadd.f32 %v1548, %v1601
    %v1603 = vpop.f32.mrb[0].mxu0
    %v1604 = vadd.f32 %v1548, %v1603
    %v1605 = vpop.f32.mrb[0].mxu0
    %v1606 = vpop.f32.mrb[0].mxu0
    %1607 = vdwg.mxu0
    %1608 = vmatprep.subr.bf16.mxu0 %v1531
    %1609 = vmatpush1.bf16.msra.mxu0 %v1530
    %1610 = vmatprep.subr.bf16.mxu0 %v1535
    %1611 = vmatpush1.bf16.msra.mxu0 %v1534
    %1612 = vmatprep.subr.bf16.mxu0 %v1539
    %1613 = vmatpush1.bf16.msra.mxu0 %v1538
    %1614 = vmatprep.subr.bf16.mxu0 %v1565
    %1615 = vmatpush1.bf16.msra.mxu0 %v1562
    %1616 = vmatprep.subr.bf16.mxu0 0
    %1617 = vmatpush1.bf16.msra.mxu0 0
    %1618 = vmatprep.subr.bf16.mxu0 0
    %1619 = vmatpush1.bf16.msra.mxu0 0
    %1620 = vmatprep.subr.bf16.mxu0 0
    %1621 = vmatpush1.bf16.msra.mxu0 0
    %1622 = vmatprep.subr.bf16.mxu0 0
    %1623 = vmatpush1.bf16.msra.mxu0 0
    %1624 = vmatprep.subr.bf16.mxu0 0
    %1625 = vmatpush1.bf16.msra.mxu0 0
    %1626 = vmatprep.subr.bf16.mxu0 0
    %1627 = vmatpush1.bf16.msra.mxu0 0
    %1628 = vmatprep.subr.bf16.mxu0 0
    %1629 = vmatpush1.bf16.msra.mxu0 0
    %1630 = vmatprep.subr.bf16.mxu0 0
    %1631 = vmatpush1.bf16.msra.mxu0 0
    %1632 = vmatprep.subr.bf16.mxu0 0
    %1633 = vmatpush1.bf16.msra.mxu0 0
    %1634 = vmatprep.subr.bf16.mxu0 0
    %1635 = vmatpush1.bf16.msra.mxu0 0
    %1636 = vmatprep.subr.bf16.mxu0 0
    %1637 = vmatpush1.bf16.msra.mxu0 0
    %1638 = vmatprep.subr.bf16.mxu0 0
    %1639 = vmatpush1.bf16.msra.mxu0 0
    %1640 = vmatprep.mubr.bf16.mxu0 0
    %1641 = vmatmul.mubr.bf16.gmra.mrb[0].mxu0 %v1552
    %v1642 = vpop.f32.mrb[0].mxu0
    %v1643 = vadd.f32 %v1548, %v1642
    %v1644 = vpop.f32.mrb[0].mxu0
    %v1645 = vadd.f32 %v1548, %v1644
    %v1646 = vpop.f32.mrb[0].mxu0
    %v1647 = vpop.f32.mrb[0].mxu0
    %1648 = vdwg.mxu0
    %v1653 = vcombine.low %v1602, %v1604
    %v1654 = vcombine.low %v1643, %v1645
    %1657 = vst [vmem:[#allocation2] sm:$0x77] %v1653
    %1658 = vst [vmem:[#allocation2 + $0x8] sm:$0x77] %v1654
    // Predicated region
    $region30: #{tpu_custom_call.1} parent=1 // pred_check
      _
    $region31: #{tpu_custom_call.1} parent=1 // pred_check_branch
      %1660 = sbr.rel (0) target = $region33
    $region32: #{tpu_custom_call.1} parent=1 // pred_region
      %s1662 = ssub.s32 256, 256
      %1663 = vsyncadd [#allocation3], %s1662
      %s1665 = sshll.u32 [#allocation2], 4
      %s1666 = int_to_ptr.vmem [resolvable:$true] %s1665
      %1668 = dma.vmem_to_hbm [thread:$0]  %s1666, 256, %s7, [#allocation3]
    $region33: #{tpu_custom_call.1} parent=1 // pred_fallthru
      _
    // Predicated region
    $region34: #{tpu_custom_call.1} parent=1 // pred_check
      _
    $region35: #{tpu_custom_call.1} parent=1 // pred_check_branch
      %1670 = sbr.rel (0) target = $region37
    $region36: #{tpu_custom_call.1} parent=1 // pred_region
      %1671 = dma.done [#allocation3], 256
    $region37: #{tpu_custom_call.1} parent=1 // pred_fallthru
      _
    %1672 = vsyncpa [#allocation3], 1

</llo_original>
